<compile_context>
chip_gen: v6e
topology: v6e:2x2x1
jax: 0.10.0
libtpu: 0.0.40
codegen_flags: <defaults>
</compile_context>

<pallas_src>
import functools

import jax
import jax.numpy as jnp
import numpy as np
from jax.experimental import pallas as pl
from jax.experimental.pallas import tpu as pltpu


def _cdiv(a, b):
    return -(-a // b)


def _round_up(n, m):
    return _cdiv(n, m) * m


def _expand_kernel(x_ref, p_ref, o_ref, *, ss, compute_dtype, precision):
    """x_ref: (ss, r_tile, gw), p_ref: (ss, gw, L), o_ref: (r_tile, L)."""
    # First matmul initializes the accumulator (no zeros init / extra VPU pass).
    acc = jnp.dot(
        x_ref[0].astype(compute_dtype), p_ref[0],
        precision=precision, preferred_element_type=jnp.float32)
    for k in range(1, ss):  # ss = gain**2 is tiny (4 for gain=2); unrolled
        acc = acc + jnp.dot(
            x_ref[k].astype(compute_dtype), p_ref[k],
            precision=precision, preferred_element_type=jnp.float32)
    # Single lane-dense full-width store (L is a multiple of 128 by construction
    # whenever the shape allows it).
    o_ref[...] = acc.astype(o_ref.dtype)


def _pick_g(h, s, w):
    """Fold factor g (a divisor of h) for lane-dense output stores.

    Only folds when the natural output lane width s*s*w is below 128 (small w);
    then picks the smallest divisor of h whose folded width is a multiple of 128
    (else >= 128, else h).  Keeping g minimal keeps the scatter-matmul K = g*w
    small so the kernel stays HBM-bound rather than MXU-bound.
    """
    base = s * s * w
    if base >= 128:
        return 1
    divs = [d for d in range(1, h + 1) if h % d == 0]
    for d in divs:
        if (d * base) % 128 == 0:
            return d
    for d in divs:
        if d * base >= 128:
            return d
    return h


def _pick_r_tile(rp, nb, per_row_bytes, resident_bytes, budget_bytes):
    """Largest row tile (multiple of 8; divisor of rp when possible) whose padded,
    double-buffered pipeline footprint fits budget_bytes; keeps >= 2 grid steps
    overall so both TensorCores of a v7x chip get work."""
    if rp <= 8:
        return rp
    cap = (budget_bytes - resident_bytes) // max(per_row_bytes, 1)
    cap = max(8, (cap // 8) * 8)
    if cap >= rp:
        r_tile = rp
    else:
        r_tile = cap  # masked edge block if it does not divide rp
        d = cap
        while d >= 8:
            if rp % d == 0:
                r_tile = d
                break
            d -= 8
    # Megacore: guarantee >= 2 grid steps overall.
    if nb * _cdiv(rp, r_tile) < 2:
        half = max(8, (rp // 2) // 8 * 8)
        if half < rp:
            r_tile = half
    return r_tile


def expand(x, gain=2):
    """Expand forward. x: (B, C, H, W) -> (B, C//gain^2, H*gain, W*gain)."""
    b, c, h, w = x.shape
    s = int(gain)
    if s == 1:
        return x
    assert c % (s * s) == 0, "channels must be divisible by gain**2"
    ss = s * s
    c2 = c // ss

    g = _pick_g(h, s, w)
    hg = h // g
    rp = c2 * hg              # merged (channel_out, h-group) rows
    gw = g * w                # input lanes per (s1, s2) plane
    lanes_out = g * ss * w    # output lane width (multiple of 128 when possible)

    # dtype-aware compute path.
    if x.dtype == jnp.bfloat16:
        compute_dtype = jnp.bfloat16
        precision = None                      # single-pass MXU, exact for {0,1} P
    else:
        compute_dtype = jnp.float32
        precision = jax.lax.Precision.HIGHEST  # exact f32 pass-through

    # Precompute the one-hot scatter matrices on the host (grid-invariant input,
    # kept VMEM-resident).  P[k, (j, wi), (j, s1, wi, s2)] = 1 with k = s1*s + s2.
    k_idx = np.arange(ss)
    s1 = k_idx // s
    s2 = k_idx % s
    i_idx = np.arange(gw)
    j = i_idx // w
    wi = i_idx % w
    o_tgt = (j[None, :] * (ss * w) + s1[:, None] * (w * s)
             + wi[None, :] * s + s2[:, None])              # (ss, gw)
    p_np = np.zeros((ss, gw, lanes_out), dtype=np.float32)
    p_np[k_idx[:, None], i_idx[None, :], o_tgt] = 1.0
    p = jnp.asarray(p_np, dtype=compute_dtype)

    # Free metadata reshape: channel = k*c2 + ci, h = hg*g + j.
    x5 = x.reshape(b, ss, rp, gw)

    # VMEM budgeting with PADDED block sizes, derived from the chip's capacity
    # (v7x: 64 MiB per TensorCore; v5e/v6e: 128 MiB).
    try:
        vmem_cap = int(pltpu.get_tpu_info().vmem_capacity_bytes)
    except Exception:
        vmem_cap = 64 * 1024 * 1024           # conservative (v7x) default
    budget = min(vmem_cap // 2, 48 * 1024 * 1024)

    x_isz = jnp.dtype(x.dtype).itemsize
    p_isz = jnp.dtype(compute_dtype).itemsize
    gw_pad = _round_up(gw, 128)
    l_pad = _round_up(lanes_out, 128)
    per_row = (2 * ss * gw_pad * x_isz        # double-buffered input block
               + 2 * l_pad * x_isz            # double-buffered output block
               + l_pad * 4)                   # f32 accumulator
    resident = 2 * ss * _round_up(gw, 8) * l_pad * p_isz   # scatter matrices
    r_tile = _pick_r_tile(rp, b, per_row, resident, budget)

    grid = (b, _cdiv(rp, r_tile))
    vmem_limit = int(max(32 * 1024 * 1024,
                         min(budget + 16 * 1024 * 1024, (vmem_cap * 3) // 4)))

    kernel = functools.partial(_expand_kernel, ss=ss,
                               compute_dtype=compute_dtype, precision=precision)

    out3 = pl.pallas_call(
        kernel,
        out_shape=jax.ShapeDtypeStruct((b, rp, lanes_out), x.dtype),
        grid_spec=pltpu.PrefetchScalarGridSpec(
            num_scalar_prefetch=0,
            grid=grid,
            in_specs=[
                pl.BlockSpec((None, ss, r_tile, gw),
                             lambda bi, ri: (bi, 0, ri, 0)),
                # Grid-invariant scatter matrices: constant index_map, DMA'd once.
                pl.BlockSpec((ss, gw, lanes_out),
                             lambda bi, ri: (0, 0, 0)),
            ],
            out_specs=pl.BlockSpec((None, r_tile, lanes_out),
                                   lambda bi, ri: (bi, ri, 0)),
        ),
        compiler_params=pltpu.CompilerParams(
            dimension_semantics=("parallel", "parallel"),
            vmem_limit_bytes=vmem_limit,
        ),
    )(x5, p)

    # Free metadata reshape back to the PyTorch output layout.
    return out3.reshape(b, c2, h * s, w * s)


def _expand_ref(x, gain=2):
    b, c, h, w = x.shape
    s = gain
    x6 = x.reshape(b, s, s, c // (s * s), h, w)
    x6 = jnp.transpose(x6, (0, 3, 4, 1, 5, 2))
    return x6.reshape(b, c // (s * s), h * s, w * s)


if __name__ == "__main__":
    root = jax.random.PRNGKey(0)
    k1, k2, k3 = jax.random.split(root, 3)

    # Primary case (module default gain=2).
    x = jax.random.normal(k1, (2, 4, 16, 16), dtype=jnp.float32)
    out = jax.block_until_ready(expand(x, gain=2))
    ref = _expand_ref(x, gain=2)
    assert out.shape == ref.shape == (2, 1, 32, 32)
    assert out.dtype == x.dtype
    assert jnp.allclose(out, ref, atol=1e-6, rtol=1e-6), "f32 mismatch vs reference"

    # More channels so c // gain**2 > 1.
    x2 = jax.random.normal(k2, (2, 8, 16, 16), dtype=jnp.float32)
    out2 = jax.block_until_ready(expand(x2, gain=2))
    ref2 = _expand_ref(x2, gain=2)
    assert out2.shape == ref2.shape == (2, 2, 32, 32)
    assert jnp.allclose(out2, ref2, atol=1e-6, rtol=1e-6), "f32 mismatch vs reference"

    # bf16 path (stays bf16 on the MXU, no f32 upcast / multi-pass emulation).
    x3 = jax.random.normal(k3, (2, 8, 16, 16), dtype=jnp.bfloat16)
    out3 = jax.block_until_ready(expand(x3, gain=2))
    ref3 = _expand_ref(x3, gain=2)
    assert out3.shape == ref3.shape == (2, 2, 32, 32)
    assert out3.dtype == jnp.bfloat16
    assert jnp.allclose(out3.astype(jnp.float32), ref3.astype(jnp.float32),
                        atol=1e-2, rtol=1e-2), "bf16 mismatch vs reference"

    print("KERNEL_OK")
</pallas_src>

<mosaic_0001>
module attributes {stable_mosaic.version = 11 : i64} {
  func.func @_expand_kernel(%arg0: i32, %arg1: i32, %arg2: memref<1x4x8x32xf32, #tpu.memory_space<vmem>>, %arg3: memref<4x32x128xf32, #tpu.memory_space<vmem>>, %arg4: memref<1x8x128xf32, #tpu.memory_space<vmem>>) attributes {dimension_semantics = [#tpu.dimension_semantics<parallel>, #tpu.dimension_semantics<parallel>], iteration_bounds = array<i64: 2, 1>, scalar_prefetch = 0 : i64, scratch_operands = 0 : i64, tpu.core_type = #tpu.core_type<tc>, window_params = [{transform_indices = @transform_0, window_bounds = array<i64: 1, 4, 8, 32>}, {pipeline_mode = #tpu.pipeline_mode<synchronous>, transform_indices = @transform_1, window_bounds = array<i64: 4, 32, 128>}, {transform_indices = @transform_2, window_bounds = array<i64: 1, 8, 128>}]} {
    %c0 = arith.constant 0 : index
    %c0_0 = arith.constant 0 : index
    %c0_1 = arith.constant 0 : index
    %c0_2 = arith.constant 0 : index
    %0 = vector.load %arg2[%c0, %c0_0, %c0_1, %c0_2] : memref<1x4x8x32xf32, #tpu.memory_space<vmem>>, vector<1x1x8x32xf32>
    %1 = vector.shape_cast %0 : vector<1x1x8x32xf32> to vector<8x32xf32>
    %c0_3 = arith.constant 0 : index
    %c0_4 = arith.constant 0 : index
    %c0_5 = arith.constant 0 : index
    %2 = vector.load %arg3[%c0_3, %c0_4, %c0_5] : memref<4x32x128xf32, #tpu.memory_space<vmem>>, vector<1x32x128xf32>
    %3 = vector.shape_cast %2 : vector<1x32x128xf32> to vector<32x128xf32>
    %cst = arith.constant dense<0.000000e+00> : vector<8x128xf32>
    %4 = tpu.matmul %1, %3, %cst {dimension_numbers = #tpu.dot_dimension_numbers<[1], [0], [0], [1], [0, 0, 1, 1], [], []>, precision = #tpu.contract_precision<fp32>} : vector<8x32xf32>, vector<32x128xf32>, vector<8x128xf32> -> vector<8x128xf32>
    %c0_6 = arith.constant 0 : index
    %c1 = arith.constant 1 : index
    %c0_7 = arith.constant 0 : index
    %c0_8 = arith.constant 0 : index
    %5 = vector.load %arg2[%c0_6, %c1, %c0_7, %c0_8] : memref<1x4x8x32xf32, #tpu.memory_space<vmem>>, vector<1x1x8x32xf32>
    %6 = vector.shape_cast %5 : vector<1x1x8x32xf32> to vector<8x32xf32>
    %c1_9 = arith.constant 1 : index
    %c0_10 = arith.constant 0 : index
    %c0_11 = arith.constant 0 : index
    %7 = vector.load %arg3[%c1_9, %c0_10, %c0_11] : memref<4x32x128xf32, #tpu.memory_space<vmem>>, vector<1x32x128xf32>
    %8 = vector.shape_cast %7 : vector<1x32x128xf32> to vector<32x128xf32>
    %cst_12 = arith.constant dense<0.000000e+00> : vector<8x128xf32>
    %9 = tpu.matmul %6, %8, %cst_12 {dimension_numbers = #tpu.dot_dimension_numbers<[1], [0], [0], [1], [0, 0, 1, 1], [], []>, precision = #tpu.contract_precision<fp32>} : vector<8x32xf32>, vector<32x128xf32>, vector<8x128xf32> -> vector<8x128xf32>
    %10 = arith.addf %4, %9 : vector<8x128xf32>
    %c0_13 = arith.constant 0 : index
    %c2 = arith.constant 2 : index
    %c0_14 = arith.constant 0 : index
    %c0_15 = arith.constant 0 : index
    %11 = vector.load %arg2[%c0_13, %c2, %c0_14, %c0_15] : memref<1x4x8x32xf32, #tpu.memory_space<vmem>>, vector<1x1x8x32xf32>
    %12 = vector.shape_cast %11 : vector<1x1x8x32xf32> to vector<8x32xf32>
    %c2_16 = arith.constant 2 : index
    %c0_17 = arith.constant 0 : index
    %c0_18 = arith.constant 0 : index
    %13 = vector.load %arg3[%c2_16, %c0_17, %c0_18] : memref<4x32x128xf32, #tpu.memory_space<vmem>>, vector<1x32x128xf32>
    %14 = vector.shape_cast %13 : vector<1x32x128xf32> to vector<32x128xf32>
    %cst_19 = arith.constant dense<0.000000e+00> : vector<8x128xf32>
    %15 = tpu.matmul %12, %14, %cst_19 {dimension_numbers = #tpu.dot_dimension_numbers<[1], [0], [0], [1], [0, 0, 1, 1], [], []>, precision = #tpu.contract_precision<fp32>} : vector<8x32xf32>, vector<32x128xf32>, vector<8x128xf32> -> vector<8x128xf32>
    %16 = arith.addf %10, %15 : vector<8x128xf32>
    %c0_20 = arith.constant 0 : index
    %c3 = arith.constant 3 : index
    %c0_21 = arith.constant 0 : index
    %c0_22 = arith.constant 0 : index
    %17 = vector.load %arg2[%c0_20, %c3, %c0_21, %c0_22] : memref<1x4x8x32xf32, #tpu.memory_space<vmem>>, vector<1x1x8x32xf32>
    %18 = vector.shape_cast %17 : vector<1x1x8x32xf32> to vector<8x32xf32>
    %c3_23 = arith.constant 3 : index
    %c0_24 = arith.constant 0 : index
    %c0_25 = arith.constant 0 : index
    %19 = vector.load %arg3[%c3_23, %c0_24, %c0_25] : memref<4x32x128xf32, #tpu.memory_space<vmem>>, vector<1x32x128xf32>
    %20 = vector.shape_cast %19 : vector<1x32x128xf32> to vector<32x128xf32>
    %cst_26 = arith.constant dense<0.000000e+00> : vector<8x128xf32>
    %21 = tpu.matmul %18, %20, %cst_26 {dimension_numbers = #tpu.dot_dimension_numbers<[1], [0], [0], [1], [0, 0, 1, 1], [], []>, precision = #tpu.contract_precision<fp32>} : vector<8x32xf32>, vector<32x128xf32>, vector<8x128xf32> -> vector<8x128xf32>
    %22 = arith.addf %16, %21 : vector<8x128xf32>
    %c0_27 = arith.constant 0 : index
    %c0_28 = arith.constant 0 : index
    %c0_29 = arith.constant 0 : index
    %23 = vector.load %arg4[%c0_27, %c0_28, %c0_29] : memref<1x8x128xf32, #tpu.memory_space<vmem>>, vector<1x8x128xf32>
    %24 = vector.shape_cast %23 : vector<1x8x128xf32> to vector<8x128xf32>
    %25 = vector.shape_cast %22 : vector<8x128xf32> to vector<1x8x128xf32>
    tpu.vector_store %arg4[%c0_27, %c0_28, %c0_29], %25 {strides = array<i32>} : memref<1x8x128xf32, #tpu.memory_space<vmem>>, vector<1x8x128xf32>,
    return
  }
  func.func @transform_0(%arg0: i32, %arg1: i32) -> (i32, i32, i32, i32) {
    %c0_i32 = arith.constant 0 : i32
    %c0_i32_0 = arith.constant 0 : i32
    %c0_i32_1 = arith.constant 0 : i32
    return %arg0, %c0_i32, %arg1, %c0_i32_0 : i32, i32, i32, i32
  }
  func.func @transform_1(%arg0: i32, %arg1: i32) -> (i32, i32, i32) {
    %c0_i32 = arith.constant 0 : i32
    %c0_i32_0 = arith.constant 0 : i32
    %c0_i32_1 = arith.constant 0 : i32
    %c0_i32_2 = arith.constant 0 : i32
    return %c0_i32, %c0_i32_0, %c0_i32_1 : i32, i32, i32
  }
  func.func @transform_2(%arg0: i32, %arg1: i32) -> (i32, i32, i32) {
    %c0_i32 = arith.constant 0 : i32
    %c0_i32_0 = arith.constant 0 : i32
    return %arg0, %arg1, %c0_i32 : i32, i32, i32
  }
}

</mosaic_0001>

<llo_original>
// kernel: tpu_custom_call.1
$region0: #{tpu_custom_call.1}
  #allocation0 [shape = 'u32[]', space=smem, size = 0x4, offset = 0x4, fixed_abs, tag = 'smem constant byte address 0x4 - core index']
  #allocation1 [shape = 'u32[144,128]{1,0:T(1,128)}', space=vmem, size = 0x12000, scoped, tag = 'internal scratch']
  %s0 = inlined_call_operand.hbm [shape: f32[2,4,8,32], index: 0, kind: input, shape index: {}]
  %s1 = inlined_call_operand.hbm [shape: f32[4,32,128], index: 1, kind: input, shape index: {}]
  %s2 = inlined_call_operand.hbm [shape: f32[2,8,128], index: 2, kind: output, shape index: {}]
  %s3 = sld [smem:[#allocation0]]
  $region49: #{tpu_custom_call.1} parent=0
    _
  %s5 = ssub.s32 1, %s3
  %s6 = scalar_select 0, %s5, %s3
  $region1: #{tpu_custom_call.1} parent=0
    #allocation2 [shape = 'u8[32768]{0}', space=vmem, size = 0x8000, scoped, tag = 'input window, operand 0']
    #allocation3 [shape = 's32[2]{0}', space=sflag, size = 0x8, scoped, tag = 'scoped memory for tpu_custom_call.1']
    #allocation4 [shape = 's32[2]{0}', space=sflag, size = 0x8, scoped, tag = 'scoped memory for tpu_custom_call.1']
    #allocation5 [shape = 'u8[65536]{0}', space=vmem, size = 0x10000, scoped, tag = 'input window, operand 1, single buffered']
    #allocation6 [shape = 's32[1]{0}', space=sflag, size = 0x4, scoped, tag = 'scoped memory for tpu_custom_call.1']
    #allocation7 [shape = 'u8[8192]{0}', space=vmem, size = 0x2000, scoped, tag = 'output window, operand 0']
    %7 = vsyncpa [#allocation3], 0
    %s8 = scalar_lea.sflag [#allocation3], 1
    %9 = vsyncpa %s8, 0
    %10 = vsyncpa [#allocation6], 0
    %11 = vsyncpa [#allocation4], 0
    %s12 = scalar_lea.sflag [#allocation4], 1
    %13 = vsyncpa %s12, 0
    loop: start=0, step=1, limit=4
    $region2: #{tpu_custom_call.1} parent=1 // loop_pre_header
      _
    $region3: #{tpu_custom_call.1} parent=1 // loop_header
      %s15 = sphi 0, %s19
      %p16 = scmp.ge.s32.totalorder %s15, 4
      %s22 = sphi 0, %s34
      %s23 = sphi 0, %s30
      %s24 = sphi 0, %s22
      %s25 = sphi 0, %s23
      %s26 = sphi 0, %s24
      %s27 = sphi 0, %s25
      %s39 = sphi 0, %s41
      %s42 = sphi 0, %s39
      %s43 = sphi 0, %s42
      %s59 = sphi 0, %s43
      %s63 = sphi 0, %s63
      %s65 = sphi 0, %s63
      %s66 = sphi 0, %s65
      %s80 = sphi 0, %s66
      %s88 = sphi 0, %s90
      %s91 = sphi 0, %s88
      %s92 = sphi 0, %s91
      %s108 = sphi 0, %s92
    $region4: #{tpu_custom_call.1} parent=1 // loop_header_branch
      %18 = sbr.rel (%p16) target = $region8
    $region5: #{tpu_custom_call.1} parent=1 // loop_body
      %s20 = ssub.s32 %s15, 1
      %s21 = ssub.s32 %s15, 2
      %s28 = sadd.s32 1, %s23
      %p29 = scmp.ge.s32.totalorder %s28, 1
      %s30 = scalar_select %p29, 0, %s28
      %s31 = sadd.s32 1, %s22
      %s32 = scalar_select %p29, %s31, %s22
      %p33 = scmp.ge.s32.totalorder %s32, 2
      %s34 = scalar_select %p33, 0, %s32
      %s35 = ssub.s32 %s22, %s34
      %s36 = ssub.s32 %s23, %s30
      %s37 = sor.u32 %s35, %s36
      %p38 = scmp.eq.s32.totalorder %s37, 0
      %s40 = sadd.s32 %s39, 1
      %s41 = scalar_select %p38, %s39, %s40
      %p44 = pneg %p38
      %p45 = scmp.eq.s32.totalorder %s15, 1
      %p46 = por %p44, %p45
      %p47 = scmp.ne.s32.totalorder %s39, %s42
      %p48 = scmp.eq.s32.totalorder %s15, 0
      %p49 = por %p47, %p48
      %p50 = scmp.ne.s32.totalorder %s39, %s42
      %p51 = scmp.eq.s32.totalorder %s20, 1
      %p52 = por %p50, %p51
      %p53 = scmp.ne.s32.totalorder %s42, %s43
      %p54 = scmp.eq.s32.totalorder %s20, 0
      %p55 = por %p53, %p54
      %p56 = scmp.ne.s32.totalorder %s42, %s43
      %p57 = scmp.eq.s32.totalorder %s21, 1
      %p58 = por %p56, %p57
      %p60 = scmp.ne.s32.totalorder %s43, %s59
      %p61 = scmp.eq.s32.totalorder %s21, 0
      %p62 = por %p60, %p61
      %s64 = sadd.s32 %s63, 1
      %p67 = scmp.eq.s32.totalorder %s15, 1
      %p68 = scmp.ne.s32.totalorder %s63, %s65
      %p69 = scmp.eq.s32.totalorder %s15, 0
      %p70 = por %p68, %p69
      %p71 = scmp.ne.s32.totalorder %s63, %s65
      %p72 = scmp.eq.s32.totalorder %s20, 1
      %p73 = por %p71, %p72
      %p74 = scmp.ne.s32.totalorder %s65, %s66
      %p75 = scmp.eq.s32.totalorder %s20, 0
      %p76 = por %p74, %p75
      %p77 = scmp.ne.s32.totalorder %s65, %s66
      %p78 = scmp.eq.s32.totalorder %s21, 1
      %p79 = por %p77, %p78
      %p81 = scmp.ne.s32.totalorder %s66, %s80
      %p82 = scmp.eq.s32.totalorder %s21, 0
      %p83 = por %p81, %p82
      %s84 = ssub.s32 %s22, %s34
      %s85 = ssub.s32 %s23, %s30
      %s86 = sor.u32 %s84, %s85
      %p87 = scmp.eq.s32.totalorder %s86, 0
      %s89 = sadd.s32 %s88, 1
      %s90 = scalar_select %p87, %s88, %s89
      %p93 = pneg %p87
      %p94 = scmp.eq.s32.totalorder %s15, 1
      %p95 = por %p93, %p94
      %p96 = scmp.ne.s32.totalorder %s88, %s91
      %p97 = scmp.eq.s32.totalorder %s15, 0
      %p98 = por %p96, %p97
      %p99 = scmp.ne.s32.totalorder %s88, %s91
      %p100 = scmp.eq.s32.totalorder %s20, 1
      %p101 = por %p99, %p100
      %p102 = scmp.ne.s32.totalorder %s91, %s92
      %p103 = scmp.eq.s32.totalorder %s20, 0
      %p104 = por %p102, %p103
      %p105 = scmp.ne.s32.totalorder %s91, %s92
      %p106 = scmp.eq.s32.totalorder %s21, 1
      %p107 = por %p105, %p106
      %p109 = scmp.ne.s32.totalorder %s92, %s108
      %p110 = scmp.eq.s32.totalorder %s21, 0
      %p111 = por %p109, %p110
      %p112 = scmp.le.s32.totalorder 1, %s15
      %p113 = scmp.lt.s32.totalorder %s15, 3
      %p114 = pnand %p112, %p113
      %p115 = pneg %p114
      // Predicated region
      $region9: #{tpu_custom_call.1} parent=5 // pred_check
        _
      $region10: #{tpu_custom_call.1} parent=5 // pred_check_branch
        %117 = sbr.rel (%p114) target = $region12
      $region11: #{tpu_custom_call.1} parent=5 // pred_region
        %s118 = ssub.s32 %s15, 1
        // Predicated region
        $region13: #{tpu_custom_call.1} parent=11 // pred_check
          %p119 = pneg %p76
        $region14: #{tpu_custom_call.1} parent=11 // pred_check_branch
          %121 = sbr.rel (%p119) target = $region16
        $region15: #{tpu_custom_call.1} parent=11 // pred_region
          %s123 = ssub.s32 2048, 2048
          %124 = vsyncadd [#allocation6], %s123
          %s125 = sshll.u32 [#allocation5], 4
          %s126 = int_to_ptr.vmem [resolvable:$true] %s125
          %131 = dma.hbm_to_vmem [thread:$0]  %s1, 2048, %s126, [#allocation6], 128, 128, 8
        $region16: #{tpu_custom_call.1} parent=11 // pred_fallthru
          _
      $region12: #{tpu_custom_call.1} parent=5 // pred_fallthru
        _
      %p132 = scmp.lt.s32.totalorder %s15, 2
      // Predicated region
      $region17: #{tpu_custom_call.1} parent=5 // pred_check
        %p133 = pneg %p132
      $region18: #{tpu_custom_call.1} parent=5 // pred_check_branch
        %135 = sbr.rel (%p133) target = $region20
      $region19: #{tpu_custom_call.1} parent=5 // pred_region
        // Predicated region
        $region21: #{tpu_custom_call.1} parent=19 // pred_check
          %p136 = pneg %p49
        $region22: #{tpu_custom_call.1} parent=19 // pred_check_branch
          %138 = sbr.rel (%p136) target = $region24
        $region23: #{tpu_custom_call.1} parent=19 // pred_region
          %s139 = sand.u32 %s39, 1
          %s140 = scalar_lea.sflag [#allocation3], %s139
          %s141 = sand.u32 %s39, 1
          %s142 = smul.addr %s141, 32
          %s143 = scalar_lea.vmem [#allocation2], %s142
          %s145 = ssub.s32 512, 512
          %146 = vsyncadd %s140, %s145
          %s147 = smul.addr %s22, 4
          %s148 = sadd.s32 %s23, %s147
          %s149 = smul.addr %s148, 128
          %s150 = scalar_lea.hbm %s0, %s149
          %s151 = sshll.u32 %s143, 4
          %s152 = int_to_ptr.vmem [resolvable:$true] %s151
          %157 = dma.hbm_to_vmem [thread:$0]  %s150, 512, %s152, %s140, 128, 128, 8
        $region24: #{tpu_custom_call.1} parent=19 // pred_fallthru
          _
      $region20: #{tpu_custom_call.1} parent=5 // pred_fallthru
        _
      %p158 = scmp.le.s32.totalorder 1, %s15
      %p159 = scmp.lt.s32.totalorder %s15, 3
      %p160 = pnand %p158, %p159
      %p161 = pneg %p160
      // Predicated region
      $region25: #{tpu_custom_call.1} parent=5 // pred_check
        _
      $region26: #{tpu_custom_call.1} parent=5 // pred_check_branch
        %163 = sbr.rel (%p160) target = $region28
      $region27: #{tpu_custom_call.1} parent=5 // pred_region
        %s164 = ssub.s32 %s15, 1
        %s165 = sand.u32 %s42, 1
        %s166 = scalar_lea.sflag [#allocation3], %s165
        %s167 = sand.u32 %s42, 1
        %s168 = smul.addr %s167, 32
        %s169 = scalar_lea.vmem [#allocation2], %s168
        // Predicated region
        $region29: #{tpu_custom_call.1} parent=27 // pred_check
          %p170 = pneg %p55
        $region30: #{tpu_custom_call.1} parent=27 // pred_check_branch
          %172 = sbr.rel (%p170) target = $region32
        $region31: #{tpu_custom_call.1} parent=27 // pred_region
          %173 = dma.done %s166, 512
        $region32: #{tpu_custom_call.1} parent=27 // pred_fallthru
          _
        // Predicated region
        $region33: #{tpu_custom_call.1} parent=27 // pred_check
          %p174 = pneg %p76
        $region34: #{tpu_custom_call.1} parent=27 // pred_check_branch
          %176 = sbr.rel (%p174) target = $region36
        $region35: #{tpu_custom_call.1} parent=27 // pred_region
          %177 = dma.done [#allocation6], 2048
        $region36: #{tpu_custom_call.1} parent=27 // pred_fallthru
          _
        %s178 = sand.u32 %s42, 1
        %s179 = scalar_lea.sflag [#allocation3], %s178
        %s180 = sand.u32 %s42, 1
        %s181 = smul.addr %s180, 32
        %s182 = scalar_lea.vmem [#allocation2], %s181
        %p183 = pneg %p55
        %p184 = pneg %p52
        %p185 = pneg %p76
        %p186 = pneg %p73
        %p187 = pneg %p104
        %p188 = pneg %p101
        %s189 = sand.u32 %s91, 1
        %s190 = scalar_lea.sflag [#allocation4], %s189
        %s191 = sand.u32 %s91, 1
        %s192 = smul.addr %s191, 8
        %s193 = scalar_lea.vmem [#allocation7], %s192
        %v194 = vld [vmem:[%s169] sm:$0xff]
        %v195 = vld [vmem:[#allocation5] sm:$0xff]
        %v196 = vld [vmem:[#allocation5 + $0x8] sm:$0xff]
        %v197 = vld [vmem:[#allocation5 + $0x10] sm:$0xff]
        %v198 = vld [vmem:[#allocation5 + $0x18] sm:$0xff]
        %s199 = scalar_lea.vmem %s169, 8 [#allocation2]
        %v200 = vld [vmem:[%s199] sm:$0xff]
        %s201 = scalar_lea.vmem [#allocation5], 32
        %v202 = vld [vmem:[%s201] sm:$0xff]
        %v203 = vld [vmem:[%s201 + $0x8] sm:$0xff]
        %v204 = vld [vmem:[%s201 + $0x10] sm:$0xff]
        %v205 = vld [vmem:[%s201 + $0x18] sm:$0xff]
        %vm206 = vcmask 261120
        %v208 = vsel %vm206, %v200, 0
        %210 = vmatprep.subr.mxu0 0.0
        %211 = vmatpush1.msra.mxu0 0.0
        %212 = vmatprep.subr.mxu0 0.0
        %213 = vmatpush1.msra.mxu0 0.0
        %214 = vmatprep.subr.mxu0 0.0
        %215 = vmatpush1.msra.mxu0 0.0
        %216 = vmatprep.subr.mxu0 0.0
        %217 = vmatpush1.msra.mxu0 0.0
        %218 = vmatprep.subr.mxu0 0.0
        %219 = vmatpush1.msra.mxu0 0.0
        %220 = vmatprep.subr.mxu0 0.0
        %221 = vmatpush1.msra.mxu0 0.0
        %222 = vmatprep.subr.mxu0 0.0
        %223 = vmatpush1.msra.mxu0 0.0
        %224 = vmatprep.subr.mxu0 0.0
        %225 = vmatpush1.msra.mxu0 0.0
        %226 = vmatprep.subr.mxu0 0.0
        %227 = vmatpush1.msra.mxu0 0.0
        %228 = vmatprep.subr.mxu0 0.0
        %229 = vmatpush1.msra.mxu0 0.0
        %230 = vmatprep.subr.mxu0 0.0
        %231 = vmatpush1.msra.mxu0 0.0
        %232 = vmatprep.subr.mxu0 0.0
        %233 = vmatpush1.msra.mxu0 0.0
        %234 = vmatprep.subr.mxu0 0.0
        %v235 = vand.u32 %v205, 4294901760
        %236 = vmatpush1.msra.mxu0 %v235
        %237 = vmatprep.subr.mxu0 0.0
        %v238 = vand.u32 %v204, 4294901760
        %239 = vmatpush1.msra.mxu0 %v238
        %240 = vmatprep.subr.mxu0 0.0
        %v241 = vand.u32 %v203, 4294901760
        %242 = vmatpush1.msra.mxu0 %v241
        %243 = vmatprep.subr.mxu0 0.0
        %v244 = vand.u32 %v202, 4294901760
        %245 = vmatpush1.msra.mxu0 %v244
        %246 = vmatprep.subr.mxu0 0.0
        %247 = vmatpush2.msra.mxu0 0.0
        %248 = vmatprep.subr.mxu0 0.0
        %249 = vmatpush2.msra.mxu0 0.0
        %250 = vmatprep.subr.mxu0 0.0
        %251 = vmatpush2.msra.mxu0 0.0
        %252 = vmatprep.subr.mxu0 0.0
        %253 = vmatpush2.msra.mxu0 0.0
        %254 = vmatprep.subr.mxu0 0.0
        %255 = vmatpush2.msra.mxu0 0.0
        %256 = vmatprep.subr.mxu0 0.0
        %257 = vmatpush2.msra.mxu0 0.0
        %258 = vmatprep.subr.mxu0 0.0
        %259 = vmatpush2.msra.mxu0 0.0
        %260 = vmatprep.subr.mxu0 0.0
        %261 = vmatpush2.msra.mxu0 0.0
        %262 = vmatprep.subr.mxu0 0.0
        %263 = vmatpush2.msra.mxu0 0.0
        %264 = vmatprep.subr.mxu0 0.0
        %265 = vmatpush2.msra.mxu0 0.0
        %266 = vmatprep.subr.mxu0 0.0
        %267 = vmatpush2.msra.mxu0 0.0
        %268 = vmatprep.subr.mxu0 0.0
        %269 = vmatpush2.msra.mxu0 0.0
        %270 = vmatprep.subr.mxu0 0.0
        %271 = vmatpush2.msra.mxu0 0.0
        %272 = vmatprep.subr.mxu0 0.0
        %273 = vmatpush2.msra.mxu0 0.0
        %274 = vmatprep.subr.mxu0 0.0
        %275 = vmatpush2.msra.mxu0 0.0
        %276 = vmatprep.subr.mxu0 0.0
        %277 = vmatpush2.msra.mxu0 0.0
        %278 = vmatprep.mubr.f32.mxu0 0.0
        %v279 = vand.u32 %v208, 4294901760
        %v280 = vsub.f32 %v208, %v279
        %v281 = vand.u32 %v280, 4294901760
        %v282 = vsub.f32 %v280, %v281
        %v283 = vand.u32 %v282, 4294901760
        %284 = vmatmul.mubr.f32.gmra.mxu0 %v283
        %v285 = vpop.f32.mrf.mxu0
        %v286 = vadd.f32 0.0, %v285
        %v287 = vpop.f32.mrf.mxu0
        %288 = vdwg.mxu0
        %289 = vmatprep.subr.mxu0 0.0
        %290 = vmatpush1.msra.mxu0 0.0
        %291 = vmatprep.subr.mxu0 0.0
        %292 = vmatpush1.msra.mxu0 0.0
        %293 = vmatprep.subr.mxu0 0.0
        %294 = vmatpush1.msra.mxu0 0.0
        %295 = vmatprep.subr.mxu0 0.0
        %296 = vmatpush1.msra.mxu0 0.0
        %297 = vmatprep.subr.mxu0 0.0
        %298 = vmatpush1.msra.mxu0 0.0
        %299 = vmatprep.subr.mxu0 0.0
        %300 = vmatpush1.msra.mxu0 0.0
        %301 = vmatprep.subr.mxu0 0.0
        %302 = vmatpush1.msra.mxu0 0.0
        %303 = vmatprep.subr.mxu0 0.0
        %304 = vmatpush1.msra.mxu0 0.0
        %305 = vmatprep.subr.mxu0 0.0
        %306 = vmatpush1.msra.mxu0 0.0
        %307 = vmatprep.subr.mxu0 0.0
        %308 = vmatpush1.msra.mxu0 0.0
        %309 = vmatprep.subr.mxu0 0.0
        %310 = vmatpush1.msra.mxu0 0.0
        %311 = vmatprep.subr.mxu0 0.0
        %312 = vmatpush1.msra.mxu0 0.0
        %313 = vmatprep.subr.mxu0 0.0
        %v314 = vand.u32 %v205, 4294901760
        %v315 = vsub.f32 %v205, %v314
        %v316 = vand.u32 %v315, 4294901760
        %v317 = vsub.f32 %v315, %v316
        %v318 = vand.u32 %v317, 4294901760
        %319 = vmatpush1.msra.mxu0 %v318
        %320 = vmatprep.subr.mxu0 0.0
        %v321 = vand.u32 %v204, 4294901760
        %v322 = vsub.f32 %v204, %v321
        %v323 = vand.u32 %v322, 4294901760
        %v324 = vsub.f32 %v322, %v323
        %v325 = vand.u32 %v324, 4294901760
        %326 = vmatpush1.msra.mxu0 %v325
        %327 = vmatprep.subr.mxu0 0.0
        %v328 = vand.u32 %v203, 4294901760
        %v329 = vsub.f32 %v203, %v328
        %v330 = vand.u32 %v329, 4294901760
        %v331 = vsub.f32 %v329, %v330
        %v332 = vand.u32 %v331, 4294901760
        %333 = vmatpush1.msra.mxu0 %v332
        %334 = vmatprep.subr.mxu0 0.0
        %v335 = vand.u32 %v202, 4294901760
        %v336 = vsub.f32 %v202, %v335
        %v337 = vand.u32 %v336, 4294901760
        %v338 = vsub.f32 %v336, %v337
        %v339 = vand.u32 %v338, 4294901760
        %340 = vmatpush1.msra.mxu0 %v339
        %341 = vmatprep.subr.mxu0 0.0
        %342 = vmatpush2.msra.mxu0 0.0
        %343 = vmatprep.subr.mxu0 0.0
        %344 = vmatpush2.msra.mxu0 0.0
        %345 = vmatprep.subr.mxu0 0.0
        %346 = vmatpush2.msra.mxu0 0.0
        %347 = vmatprep.subr.mxu0 0.0
        %348 = vmatpush2.msra.mxu0 0.0
        %349 = vmatprep.subr.mxu0 0.0
        %350 = vmatpush2.msra.mxu0 0.0
        %351 = vmatprep.subr.mxu0 0.0
        %352 = vmatpush2.msra.mxu0 0.0
        %353 = vmatprep.subr.mxu0 0.0
        %354 = vmatpush2.msra.mxu0 0.0
        %355 = vmatprep.subr.mxu0 0.0
        %356 = vmatpush2.msra.mxu0 0.0
        %357 = vmatprep.subr.mxu0 0.0
        %358 = vmatpush2.msra.mxu0 0.0
        %359 = vmatprep.subr.mxu0 0.0
        %360 = vmatpush2.msra.mxu0 0.0
        %361 = vmatprep.subr.mxu0 0.0
        %362 = vmatpush2.msra.mxu0 0.0
        %363 = vmatprep.subr.mxu0 0.0
        %364 = vmatpush2.msra.mxu0 0.0
        %365 = vmatprep.subr.mxu0 0.0
        %366 = vmatpush2.msra.mxu0 0.0
        %367 = vmatprep.subr.mxu0 0.0
        %368 = vmatpush2.msra.mxu0 0.0
        %369 = vmatprep.subr.mxu0 0.0
        %370 = vmatpush2.msra.mxu0 0.0
        %371 = vmatprep.subr.mxu0 0.0
        %372 = vmatpush2.msra.mxu0 0.0
        %373 = vmatprep.mubr.f32.mxu0 0.0
        %v374 = vand.u32 %v208, 4294901760
        %375 = vmatmul.mubr.f32.gmra.mxu0 %v374
        %v376 = vpop.f32.mrf.mxu0
        %v377 = vadd.f32 %v286, %v376
        %v378 = vpop.f32.mrf.mxu0
        %379 = vdwg.mxu0
        %380 = vmatprep.subr.mxu0 0.0
        %381 = vmatpush1.msra.mxu0 0.0
        %382 = vmatprep.subr.mxu0 0.0
        %383 = vmatpush1.msra.mxu0 0.0
        %384 = vmatprep.subr.mxu0 0.0
        %385 = vmatpush1.msra.mxu0 0.0
        %386 = vmatprep.subr.mxu0 0.0
        %387 = vmatpush1.msra.mxu0 0.0
        %388 = vmatprep.subr.mxu0 0.0
        %389 = vmatpush1.msra.mxu0 0.0
        %390 = vmatprep.subr.mxu0 0.0
        %391 = vmatpush1.msra.mxu0 0.0
        %392 = vmatprep.subr.mxu0 0.0
        %393 = vmatpush1.msra.mxu0 0.0
        %394 = vmatprep.subr.mxu0 0.0
        %395 = vmatpush1.msra.mxu0 0.0
        %396 = vmatprep.subr.mxu0 0.0
        %397 = vmatpush1.msra.mxu0 0.0
        %398 = vmatprep.subr.mxu0 0.0
        %399 = vmatpush1.msra.mxu0 0.0
        %400 = vmatprep.subr.mxu0 0.0
        %401 = vmatpush1.msra.mxu0 0.0
        %402 = vmatprep.subr.mxu0 0.0
        %403 = vmatpush1.msra.mxu0 0.0
        %404 = vmatprep.subr.mxu0 0.0
        %v405 = vand.u32 %v205, 4294901760
        %v406 = vsub.f32 %v205, %v405
        %407 = vmatpush1.msra.mxu0 %v406
        %408 = vmatprep.subr.mxu0 0.0
        %v409 = vand.u32 %v204, 4294901760
        %v410 = vsub.f32 %v204, %v409
        %411 = vmatpush1.msra.mxu0 %v410
        %412 = vmatprep.subr.mxu0 0.0
        %v413 = vand.u32 %v203, 4294901760
        %v414 = vsub.f32 %v203, %v413
        %415 = vmatpush1.msra.mxu0 %v414
        %416 = vmatprep.subr.mxu0 0.0
        %v417 = vand.u32 %v202, 4294901760
        %v418 = vsub.f32 %v202, %v417
        %419 = vmatpush1.msra.mxu0 %v418
        %420 = vmatprep.subr.mxu0 0.0
        %421 = vmatpush2.msra.mxu0 0.0
        %422 = vmatprep.subr.mxu0 0.0
        %423 = vmatpush2.msra.mxu0 0.0
        %424 = vmatprep.subr.mxu0 0.0
        %425 = vmatpush2.msra.mxu0 0.0
        %426 = vmatprep.subr.mxu0 0.0
        %427 = vmatpush2.msra.mxu0 0.0
        %428 = vmatprep.subr.mxu0 0.0
        %429 = vmatpush2.msra.mxu0 0.0
        %430 = vmatprep.subr.mxu0 0.0
        %431 = vmatpush2.msra.mxu0 0.0
        %432 = vmatprep.subr.mxu0 0.0
        %433 = vmatpush2.msra.mxu0 0.0
        %434 = vmatprep.subr.mxu0 0.0
        %435 = vmatpush2.msra.mxu0 0.0
        %436 = vmatprep.subr.mxu0 0.0
        %437 = vmatpush2.msra.mxu0 0.0
        %438 = vmatprep.subr.mxu0 0.0
        %439 = vmatpush2.msra.mxu0 0.0
        %440 = vmatprep.subr.mxu0 0.0
        %441 = vmatpush2.msra.mxu0 0.0
        %442 = vmatprep.subr.mxu0 0.0
        %443 = vmatpush2.msra.mxu0 0.0
        %444 = vmatprep.subr.mxu0 0.0
        %445 = vmatpush2.msra.mxu0 0.0
        %446 = vmatprep.subr.mxu0 0.0
        %447 = vmatpush2.msra.mxu0 0.0
        %448 = vmatprep.subr.mxu0 0.0
        %449 = vmatpush2.msra.mxu0 0.0
        %450 = vmatprep.subr.mxu0 0.0
        %451 = vmatpush2.msra.mxu0 0.0
        %452 = vmatprep.mubr.f32.mxu0 0.0
        %v453 = vand.u32 %v208, 4294901760
        %v454 = vsub.f32 %v208, %v453
        %455 = vmatmul.mubr.f32.gmra.mxu0 %v454
        %v456 = vpop.f32.mrf.mxu0
        %v457 = vadd.f32 %v377, %v456
        %v458 = vpop.f32.mrf.mxu0
        %459 = vdwg.mxu0
        %460 = vmatprep.subr.mxu0 0.0
        %461 = vmatpush1.msra.mxu0 0.0
        %462 = vmatprep.subr.mxu0 0.0
        %463 = vmatpush1.msra.mxu0 0.0
        %464 = vmatprep.subr.mxu0 0.0
        %465 = vmatpush1.msra.mxu0 0.0
        %466 = vmatprep.subr.mxu0 0.0
        %467 = vmatpush1.msra.mxu0 0.0
        %468 = vmatprep.subr.mxu0 0.0
        %469 = vmatpush1.msra.mxu0 0.0
        %470 = vmatprep.subr.mxu0 0.0
        %471 = vmatpush1.msra.mxu0 0.0
        %472 = vmatprep.subr.mxu0 0.0
        %473 = vmatpush1.msra.mxu0 0.0
        %474 = vmatprep.subr.mxu0 0.0
        %475 = vmatpush1.msra.mxu0 0.0
        %476 = vmatprep.subr.mxu0 0.0
        %477 = vmatpush1.msra.mxu0 0.0
        %478 = vmatprep.subr.mxu0 0.0
        %479 = vmatpush1.msra.mxu0 0.0
        %480 = vmatprep.subr.mxu0 0.0
        %481 = vmatpush1.msra.mxu0 0.0
        %482 = vmatprep.subr.mxu0 0.0
        %483 = vmatpush1.msra.mxu0 0.0
        %484 = vmatprep.subr.mxu0 0.0
        %v485 = vand.u32 %v205, 4294901760
        %486 = vmatpush1.msra.mxu0 %v485
        %487 = vmatprep.subr.mxu0 0.0
        %v488 = vand.u32 %v204, 4294901760
        %489 = vmatpush1.msra.mxu0 %v488
        %490 = vmatprep.subr.mxu0 0.0
        %v491 = vand.u32 %v203, 4294901760
        %492 = vmatpush1.msra.mxu0 %v491
        %493 = vmatprep.subr.mxu0 0.0
        %v494 = vand.u32 %v202, 4294901760
        %495 = vmatpush1.msra.mxu0 %v494
        %496 = vmatprep.subr.mxu0 0.0
        %497 = vmatpush2.msra.mxu0 0.0
        %498 = vmatprep.subr.mxu0 0.0
        %499 = vmatpush2.msra.mxu0 0.0
        %500 = vmatprep.subr.mxu0 0.0
        %501 = vmatpush2.msra.mxu0 0.0
        %502 = vmatprep.subr.mxu0 0.0
        %503 = vmatpush2.msra.mxu0 0.0
        %504 = vmatprep.subr.mxu0 0.0
        %505 = vmatpush2.msra.mxu0 0.0
        %506 = vmatprep.subr.mxu0 0.0
        %507 = vmatpush2.msra.mxu0 0.0
        %508 = vmatprep.subr.mxu0 0.0
        %509 = vmatpush2.msra.mxu0 0.0
        %510 = vmatprep.subr.mxu0 0.0
        %511 = vmatpush2.msra.mxu0 0.0
        %512 = vmatprep.subr.mxu0 0.0
        %513 = vmatpush2.msra.mxu0 0.0
        %514 = vmatprep.subr.mxu0 0.0
        %515 = vmatpush2.msra.mxu0 0.0
        %516 = vmatprep.subr.mxu0 0.0
        %517 = vmatpush2.msra.mxu0 0.0
        %518 = vmatprep.subr.mxu0 0.0
        %519 = vmatpush2.msra.mxu0 0.0
        %520 = vmatprep.subr.mxu0 0.0
        %521 = vmatpush2.msra.mxu0 0.0
        %522 = vmatprep.subr.mxu0 0.0
        %523 = vmatpush2.msra.mxu0 0.0
        %524 = vmatprep.subr.mxu0 0.0
        %525 = vmatpush2.msra.mxu0 0.0
        %526 = vmatprep.subr.mxu0 0.0
        %527 = vmatpush2.msra.mxu0 0.0
        %528 = vmatprep.mubr.f32.mxu0 0.0
        %v529 = vand.u32 %v208, 4294901760
        %v530 = vsub.f32 %v208, %v529
        %v531 = vand.u32 %v530, 4294901760
        %532 = vmatmul.mubr.f32.gmra.mxu0 %v531
        %v533 = vpop.f32.mrf.mxu0
        %v534 = vadd.f32 %v457, %v533
        %v535 = vpop.f32.mrf.mxu0
        %536 = vdwg.mxu0
        %537 = vmatprep.subr.mxu0 0.0
        %538 = vmatpush1.msra.mxu0 0.0
        %539 = vmatprep.subr.mxu0 0.0
        %540 = vmatpush1.msra.mxu0 0.0
        %541 = vmatprep.subr.mxu0 0.0
        %542 = vmatpush1.msra.mxu0 0.0
        %543 = vmatprep.subr.mxu0 0.0
        %544 = vmatpush1.msra.mxu0 0.0
        %545 = vmatprep.subr.mxu0 0.0
        %546 = vmatpush1.msra.mxu0 0.0
        %547 = vmatprep.subr.mxu0 0.0
        %548 = vmatpush1.msra.mxu0 0.0
        %549 = vmatprep.subr.mxu0 0.0
        %550 = vmatpush1.msra.mxu0 0.0
        %551 = vmatprep.subr.mxu0 0.0
        %552 = vmatpush1.msra.mxu0 0.0
        %553 = vmatprep.subr.mxu0 0.0
        %554 = vmatpush1.msra.mxu0 0.0
        %555 = vmatprep.subr.mxu0 0.0
        %556 = vmatpush1.msra.mxu0 0.0
        %557 = vmatprep.subr.mxu0 0.0
        %558 = vmatpush1.msra.mxu0 0.0
        %559 = vmatprep.subr.mxu0 0.0
        %560 = vmatpush1.msra.mxu0 0.0
        %561 = vmatprep.subr.mxu0 0.0
        %v562 = vand.u32 %v205, 4294901760
        %v563 = vsub.f32 %v205, %v562
        %v564 = vand.u32 %v563, 4294901760
        %565 = vmatpush1.msra.mxu0 %v564
        %566 = vmatprep.subr.mxu0 0.0
        %v567 = vand.u32 %v204, 4294901760
        %v568 = vsub.f32 %v204, %v567
        %v569 = vand.u32 %v568, 4294901760
        %570 = vmatpush1.msra.mxu0 %v569
        %571 = vmatprep.subr.mxu0 0.0
        %v572 = vand.u32 %v203, 4294901760
        %v573 = vsub.f32 %v203, %v572
        %v574 = vand.u32 %v573, 4294901760
        %575 = vmatpush1.msra.mxu0 %v574
        %576 = vmatprep.subr.mxu0 0.0
        %v577 = vand.u32 %v202, 4294901760
        %v578 = vsub.f32 %v202, %v577
        %v579 = vand.u32 %v578, 4294901760
        %580 = vmatpush1.msra.mxu0 %v579
        %581 = vmatprep.subr.mxu0 0.0
        %582 = vmatpush2.msra.mxu0 0.0
        %583 = vmatprep.subr.mxu0 0.0
        %584 = vmatpush2.msra.mxu0 0.0
        %585 = vmatprep.subr.mxu0 0.0
        %586 = vmatpush2.msra.mxu0 0.0
        %587 = vmatprep.subr.mxu0 0.0
        %588 = vmatpush2.msra.mxu0 0.0
        %589 = vmatprep.subr.mxu0 0.0
        %590 = vmatpush2.msra.mxu0 0.0
        %591 = vmatprep.subr.mxu0 0.0
        %592 = vmatpush2.msra.mxu0 0.0
        %593 = vmatprep.subr.mxu0 0.0
        %594 = vmatpush2.msra.mxu0 0.0
        %595 = vmatprep.subr.mxu0 0.0
        %596 = vmatpush2.msra.mxu0 0.0
        %597 = vmatprep.subr.mxu0 0.0
        %598 = vmatpush2.msra.mxu0 0.0
        %599 = vmatprep.subr.mxu0 0.0
        %600 = vmatpush2.msra.mxu0 0.0
        %601 = vmatprep.subr.mxu0 0.0
        %602 = vmatpush2.msra.mxu0 0.0
        %603 = vmatprep.subr.mxu0 0.0
        %604 = vmatpush2.msra.mxu0 0.0
        %605 = vmatprep.subr.mxu0 0.0
        %606 = vmatpush2.msra.mxu0 0.0
        %607 = vmatprep.subr.mxu0 0.0
        %608 = vmatpush2.msra.mxu0 0.0
        %609 = vmatprep.subr.mxu0 0.0
        %610 = vmatpush2.msra.mxu0 0.0
        %611 = vmatprep.subr.mxu0 0.0
        %612 = vmatpush2.msra.mxu0 0.0
        %613 = vmatprep.mubr.f32.mxu0 0.0
        %v614 = vand.u32 %v208, 4294901760
        %615 = vmatmul.mubr.f32.gmra.mxu0 %v614
        %v616 = vpop.f32.mrf.mxu0
        %v617 = vadd.f32 %v534, %v616
        %v618 = vpop.f32.mrf.mxu0
        %619 = vdwg.mxu0
        %620 = vmatprep.subr.mxu0 0.0
        %621 = vmatpush1.msra.mxu0 0.0
        %622 = vmatprep.subr.mxu0 0.0
        %623 = vmatpush1.msra.mxu0 0.0
        %624 = vmatprep.subr.mxu0 0.0
        %625 = vmatpush1.msra.mxu0 0.0
        %626 = vmatprep.subr.mxu0 0.0
        %627 = vmatpush1.msra.mxu0 0.0
        %628 = vmatprep.subr.mxu0 0.0
        %629 = vmatpush1.msra.mxu0 0.0
        %630 = vmatprep.subr.mxu0 0.0
        %631 = vmatpush1.msra.mxu0 0.0
        %632 = vmatprep.subr.mxu0 0.0
        %633 = vmatpush1.msra.mxu0 0.0
        %634 = vmatprep.subr.mxu0 0.0
        %635 = vmatpush1.msra.mxu0 0.0
        %636 = vmatprep.subr.mxu0 0.0
        %637 = vmatpush1.msra.mxu0 0.0
        %638 = vmatprep.subr.mxu0 0.0
        %639 = vmatpush1.msra.mxu0 0.0
        %640 = vmatprep.subr.mxu0 0.0
        %641 = vmatpush1.msra.mxu0 0.0
        %642 = vmatprep.subr.mxu0 0.0
        %643 = vmatpush1.msra.mxu0 0.0
        %644 = vmatprep.subr.mxu0 0.0
        %v645 = vand.u32 %v205, 4294901760
        %646 = vmatpush1.msra.mxu0 %v645
        %647 = vmatprep.subr.mxu0 0.0
        %v648 = vand.u32 %v204, 4294901760
        %649 = vmatpush1.msra.mxu0 %v648
        %650 = vmatprep.subr.mxu0 0.0
        %v651 = vand.u32 %v203, 4294901760
        %652 = vmatpush1.msra.mxu0 %v651
        %653 = vmatprep.subr.mxu0 0.0
        %v654 = vand.u32 %v202, 4294901760
        %655 = vmatpush1.msra.mxu0 %v654
        %656 = vmatprep.subr.mxu0 0.0
        %657 = vmatpush2.msra.mxu0 0.0
        %658 = vmatprep.subr.mxu0 0.0
        %659 = vmatpush2.msra.mxu0 0.0
        %660 = vmatprep.subr.mxu0 0.0
        %661 = vmatpush2.msra.mxu0 0.0
        %662 = vmatprep.subr.mxu0 0.0
        %663 = vmatpush2.msra.mxu0 0.0
        %664 = vmatprep.subr.mxu0 0.0
        %665 = vmatpush2.msra.mxu0 0.0
        %666 = vmatprep.subr.mxu0 0.0
        %667 = vmatpush2.msra.mxu0 0.0
        %668 = vmatprep.subr.mxu0 0.0
        %669 = vmatpush2.msra.mxu0 0.0
        %670 = vmatprep.subr.mxu0 0.0
        %671 = vmatpush2.msra.mxu0 0.0
        %672 = vmatprep.subr.mxu0 0.0
        %673 = vmatpush2.msra.mxu0 0.0
        %674 = vmatprep.subr.mxu0 0.0
        %675 = vmatpush2.msra.mxu0 0.0
        %676 = vmatprep.subr.mxu0 0.0
        %677 = vmatpush2.msra.mxu0 0.0
        %678 = vmatprep.subr.mxu0 0.0
        %679 = vmatpush2.msra.mxu0 0.0
        %680 = vmatprep.subr.mxu0 0.0
        %681 = vmatpush2.msra.mxu0 0.0
        %682 = vmatprep.subr.mxu0 0.0
        %683 = vmatpush2.msra.mxu0 0.0
        %684 = vmatprep.subr.mxu0 0.0
        %685 = vmatpush2.msra.mxu0 0.0
        %686 = vmatprep.subr.mxu0 0.0
        %687 = vmatpush2.msra.mxu0 0.0
        %688 = vmatprep.mubr.f32.mxu0 0.0
        %v689 = vand.u32 %v208, 4294901760
        %690 = vmatmul.mubr.f32.gmra.mxu0 %v689
        %v691 = vpop.f32.mrf.mxu0
        %v692 = vadd.f32 %v617, %v691
        %v693 = vpop.f32.mrf.mxu0
        %694 = vdwg.mxu0
        %v696 = vsel %vm206, %v194, 0
        %698 = vmatprep.subr.mxu0 0.0
        %699 = vmatpush1.msra.mxu0 0.0
        %700 = vmatprep.subr.mxu0 0.0
        %701 = vmatpush1.msra.mxu0 0.0
        %702 = vmatprep.subr.mxu0 0.0
        %703 = vmatpush1.msra.mxu0 0.0
        %704 = vmatprep.subr.mxu0 0.0
        %705 = vmatpush1.msra.mxu0 0.0
        %706 = vmatprep.subr.mxu0 0.0
        %707 = vmatpush1.msra.mxu0 0.0
        %708 = vmatprep.subr.mxu0 0.0
        %709 = vmatpush1.msra.mxu0 0.0
        %710 = vmatprep.subr.mxu0 0.0
        %711 = vmatpush1.msra.mxu0 0.0
        %712 = vmatprep.subr.mxu0 0.0
        %713 = vmatpush1.msra.mxu0 0.0
        %714 = vmatprep.subr.mxu0 0.0
        %715 = vmatpush1.msra.mxu0 0.0
        %716 = vmatprep.subr.mxu0 0.0
        %717 = vmatpush1.msra.mxu0 0.0
        %718 = vmatprep.subr.mxu0 0.0
        %719 = vmatpush1.msra.mxu0 0.0
        %720 = vmatprep.subr.mxu0 0.0
        %721 = vmatpush1.msra.mxu0 0.0
        %722 = vmatprep.subr.mxu0 0.0
        %v723 = vand.u32 %v198, 4294901760
        %724 = vmatpush1.msra.mxu0 %v723
        %725 = vmatprep.subr.mxu0 0.0
        %v726 = vand.u32 %v197, 4294901760
        %727 = vmatpush1.msra.mxu0 %v726
        %728 = vmatprep.subr.mxu0 0.0
        %v729 = vand.u32 %v196, 4294901760
        %730 = vmatpush1.msra.mxu0 %v729
        %731 = vmatprep.subr.mxu0 0.0
        %v732 = vand.u32 %v195, 4294901760
        %733 = vmatpush1.msra.mxu0 %v732
        %734 = vmatprep.subr.mxu0 0.0
        %735 = vmatpush2.msra.mxu0 0.0
        %736 = vmatprep.subr.mxu0 0.0
        %737 = vmatpush2.msra.mxu0 0.0
        %738 = vmatprep.subr.mxu0 0.0
        %739 = vmatpush2.msra.mxu0 0.0
        %740 = vmatprep.subr.mxu0 0.0
        %741 = vmatpush2.msra.mxu0 0.0
        %742 = vmatprep.subr.mxu0 0.0
        %743 = vmatpush2.msra.mxu0 0.0
        %744 = vmatprep.subr.mxu0 0.0
        %745 = vmatpush2.msra.mxu0 0.0
        %746 = vmatprep.subr.mxu0 0.0
        %747 = vmatpush2.msra.mxu0 0.0
        %748 = vmatprep.subr.mxu0 0.0
        %749 = vmatpush2.msra.mxu0 0.0
        %750 = vmatprep.subr.mxu0 0.0
        %751 = vmatpush2.msra.mxu0 0.0
        %752 = vmatprep.subr.mxu0 0.0
        %753 = vmatpush2.msra.mxu0 0.0
        %754 = vmatprep.subr.mxu0 0.0
        %755 = vmatpush2.msra.mxu0 0.0
        %756 = vmatprep.subr.mxu0 0.0
        %757 = vmatpush2.msra.mxu0 0.0
        %758 = vmatprep.subr.mxu0 0.0
        %759 = vmatpush2.msra.mxu0 0.0
        %760 = vmatprep.subr.mxu0 0.0
        %761 = vmatpush2.msra.mxu0 0.0
        %762 = vmatprep.subr.mxu0 0.0
        %763 = vmatpush2.msra.mxu0 0.0
        %764 = vmatprep.subr.mxu0 0.0
        %765 = vmatpush2.msra.mxu0 0.0
        %766 = vmatprep.mubr.f32.mxu0 0.0
        %v767 = vand.u32 %v696, 4294901760
        %v768 = vsub.f32 %v696, %v767
        %v769 = vand.u32 %v768, 4294901760
        %v770 = vsub.f32 %v768, %v769
        %v771 = vand.u32 %v770, 4294901760
        %772 = vmatmul.mubr.f32.gmra.mxu0 %v771
        %v773 = vpop.f32.mrf.mxu0
        %v774 = vadd.f32 %v692, %v773
        %v775 = vpop.f32.mrf.mxu0
        %776 = vdwg.mxu0
        %777 = vmatprep.subr.mxu0 0.0
        %778 = vmatpush1.msra.mxu0 0.0
        %779 = vmatprep.subr.mxu0 0.0
        %780 = vmatpush1.msra.mxu0 0.0
        %781 = vmatprep.subr.mxu0 0.0
        %782 = vmatpush1.msra.mxu0 0.0
        %783 = vmatprep.subr.mxu0 0.0
        %784 = vmatpush1.msra.mxu0 0.0
        %785 = vmatprep.subr.mxu0 0.0
        %786 = vmatpush1.msra.mxu0 0.0
        %787 = vmatprep.subr.mxu0 0.0
        %788 = vmatpush1.msra.mxu0 0.0
        %789 = vmatprep.subr.mxu0 0.0
        %790 = vmatpush1.msra.mxu0 0.0
        %791 = vmatprep.subr.mxu0 0.0
        %792 = vmatpush1.msra.mxu0 0.0
        %793 = vmatprep.subr.mxu0 0.0
        %794 = vmatpush1.msra.mxu0 0.0
        %795 = vmatprep.subr.mxu0 0.0
        %796 = vmatpush1.msra.mxu0 0.0
        %797 = vmatprep.subr.mxu0 0.0
        %798 = vmatpush1.msra.mxu0 0.0
        %799 = vmatprep.subr.mxu0 0.0
        %800 = vmatpush1.msra.mxu0 0.0
        %801 = vmatprep.subr.mxu0 0.0
        %v802 = vand.u32 %v198, 4294901760
        %v803 = vsub.f32 %v198, %v802
        %v804 = vand.u32 %v803, 4294901760
        %v805 = vsub.f32 %v803, %v804
        %v806 = vand.u32 %v805, 4294901760
        %807 = vmatpush1.msra.mxu0 %v806
        %808 = vmatprep.subr.mxu0 0.0
        %v809 = vand.u32 %v197, 4294901760
        %v810 = vsub.f32 %v197, %v809
        %v811 = vand.u32 %v810, 4294901760
        %v812 = vsub.f32 %v810, %v811
        %v813 = vand.u32 %v812, 4294901760
        %814 = vmatpush1.msra.mxu0 %v813
        %815 = vmatprep.subr.mxu0 0.0
        %v816 = vand.u32 %v196, 4294901760
        %v817 = vsub.f32 %v196, %v816
        %v818 = vand.u32 %v817, 4294901760
        %v819 = vsub.f32 %v817, %v818
        %v820 = vand.u32 %v819, 4294901760
        %821 = vmatpush1.msra.mxu0 %v820
        %822 = vmatprep.subr.mxu0 0.0
        %v823 = vand.u32 %v195, 4294901760
        %v824 = vsub.f32 %v195, %v823
        %v825 = vand.u32 %v824, 4294901760
        %v826 = vsub.f32 %v824, %v825
        %v827 = vand.u32 %v826, 4294901760
        %828 = vmatpush1.msra.mxu0 %v827
        %829 = vmatprep.subr.mxu0 0.0
        %830 = vmatpush2.msra.mxu0 0.0
        %831 = vmatprep.subr.mxu0 0.0
        %832 = vmatpush2.msra.mxu0 0.0
        %833 = vmatprep.subr.mxu0 0.0
        %834 = vmatpush2.msra.mxu0 0.0
        %835 = vmatprep.subr.mxu0 0.0
        %836 = vmatpush2.msra.mxu0 0.0
        %837 = vmatprep.subr.mxu0 0.0
        %838 = vmatpush2.msra.mxu0 0.0
        %839 = vmatprep.subr.mxu0 0.0
        %840 = vmatpush2.msra.mxu0 0.0
        %841 = vmatprep.subr.mxu0 0.0
        %842 = vmatpush2.msra.mxu0 0.0
        %843 = vmatprep.subr.mxu0 0.0
        %844 = vmatpush2.msra.mxu0 0.0
        %845 = vmatprep.subr.mxu0 0.0
        %846 = vmatpush2.msra.mxu0 0.0
        %847 = vmatprep.subr.mxu0 0.0
        %848 = vmatpush2.msra.mxu0 0.0
        %849 = vmatprep.subr.mxu0 0.0
        %850 = vmatpush2.msra.mxu0 0.0
        %851 = vmatprep.subr.mxu0 0.0
        %852 = vmatpush2.msra.mxu0 0.0
        %853 = vmatprep.subr.mxu0 0.0
        %854 = vmatpush2.msra.mxu0 0.0
        %855 = vmatprep.subr.mxu0 0.0
        %856 = vmatpush2.msra.mxu0 0.0
        %857 = vmatprep.subr.mxu0 0.0
        %858 = vmatpush2.msra.mxu0 0.0
        %859 = vmatprep.subr.mxu0 0.0
        %860 = vmatpush2.msra.mxu0 0.0
        %861 = vmatprep.mubr.f32.mxu0 0.0
        %v862 = vand.u32 %v696, 4294901760
        %863 = vmatmul.mubr.f32.gmra.mxu0 %v862
        %v864 = vpop.f32.mrf.mxu0
        %v865 = vadd.f32 %v774, %v864
        %v866 = vpop.f32.mrf.mxu0
        %867 = vdwg.mxu0
        %868 = vmatprep.subr.mxu0 0.0
        %869 = vmatpush1.msra.mxu0 0.0
        %870 = vmatprep.subr.mxu0 0.0
        %871 = vmatpush1.msra.mxu0 0.0
        %872 = vmatprep.subr.mxu0 0.0
        %873 = vmatpush1.msra.mxu0 0.0
        %874 = vmatprep.subr.mxu0 0.0
        %875 = vmatpush1.msra.mxu0 0.0
        %876 = vmatprep.subr.mxu0 0.0
        %877 = vmatpush1.msra.mxu0 0.0
        %878 = vmatprep.subr.mxu0 0.0
        %879 = vmatpush1.msra.mxu0 0.0
        %880 = vmatprep.subr.mxu0 0.0
        %881 = vmatpush1.msra.mxu0 0.0
        %882 = vmatprep.subr.mxu0 0.0
        %883 = vmatpush1.msra.mxu0 0.0
        %884 = vmatprep.subr.mxu0 0.0
        %885 = vmatpush1.msra.mxu0 0.0
        %886 = vmatprep.subr.mxu0 0.0
        %887 = vmatpush1.msra.mxu0 0.0
        %888 = vmatprep.subr.mxu0 0.0
        %889 = vmatpush1.msra.mxu0 0.0
        %890 = vmatprep.subr.mxu0 0.0
        %891 = vmatpush1.msra.mxu0 0.0
        %892 = vmatprep.subr.mxu0 0.0
        %v893 = vand.u32 %v198, 4294901760
        %v894 = vsub.f32 %v198, %v893
        %895 = vmatpush1.msra.mxu0 %v894
        %896 = vmatprep.subr.mxu0 0.0
        %v897 = vand.u32 %v197, 4294901760
        %v898 = vsub.f32 %v197, %v897
        %899 = vmatpush1.msra.mxu0 %v898
        %900 = vmatprep.subr.mxu0 0.0
        %v901 = vand.u32 %v196, 4294901760
        %v902 = vsub.f32 %v196, %v901
        %903 = vmatpush1.msra.mxu0 %v902
        %904 = vmatprep.subr.mxu0 0.0
        %v905 = vand.u32 %v195, 4294901760
        %v906 = vsub.f32 %v195, %v905
        %907 = vmatpush1.msra.mxu0 %v906
        %908 = vmatprep.subr.mxu0 0.0
        %909 = vmatpush2.msra.mxu0 0.0
        %910 = vmatprep.subr.mxu0 0.0
        %911 = vmatpush2.msra.mxu0 0.0
        %912 = vmatprep.subr.mxu0 0.0
        %913 = vmatpush2.msra.mxu0 0.0
        %914 = vmatprep.subr.mxu0 0.0
        %915 = vmatpush2.msra.mxu0 0.0
        %916 = vmatprep.subr.mxu0 0.0
        %917 = vmatpush2.msra.mxu0 0.0
        %918 = vmatprep.subr.mxu0 0.0
        %919 = vmatpush2.msra.mxu0 0.0
        %920 = vmatprep.subr.mxu0 0.0
        %921 = vmatpush2.msra.mxu0 0.0
        %922 = vmatprep.subr.mxu0 0.0
        %923 = vmatpush2.msra.mxu0 0.0
        %924 = vmatprep.subr.mxu0 0.0
        %925 = vmatpush2.msra.mxu0 0.0
        %926 = vmatprep.subr.mxu0 0.0
        %927 = vmatpush2.msra.mxu0 0.0
        %928 = vmatprep.subr.mxu0 0.0
        %929 = vmatpush2.msra.mxu0 0.0
        %930 = vmatprep.subr.mxu0 0.0
        %931 = vmatpush2.msra.mxu0 0.0
        %932 = vmatprep.subr.mxu0 0.0
        %933 = vmatpush2.msra.mxu0 0.0
        %934 = vmatprep.subr.mxu0 0.0
        %935 = vmatpush2.msra.mxu0 0.0
        %936 = vmatprep.subr.mxu0 0.0
        %937 = vmatpush2.msra.mxu0 0.0
        %938 = vmatprep.subr.mxu0 0.0
        %939 = vmatpush2.msra.mxu0 0.0
        %940 = vmatprep.mubr.f32.mxu0 0.0
        %v941 = vand.u32 %v696, 4294901760
        %v942 = vsub.f32 %v696, %v941
        %943 = vmatmul.mubr.f32.gmra.mxu0 %v942
        %v944 = vpop.f32.mrf.mxu0
        %v945 = vadd.f32 %v865, %v944
        %v946 = vpop.f32.mrf.mxu0
        %947 = vdwg.mxu0
        %948 = vmatprep.subr.mxu0 0.0
        %949 = vmatpush1.msra.mxu0 0.0
        %950 = vmatprep.subr.mxu0 0.0
        %951 = vmatpush1.msra.mxu0 0.0
        %952 = vmatprep.subr.mxu0 0.0
        %953 = vmatpush1.msra.mxu0 0.0
        %954 = vmatprep.subr.mxu0 0.0
        %955 = vmatpush1.msra.mxu0 0.0
        %956 = vmatprep.subr.mxu0 0.0
        %957 = vmatpush1.msra.mxu0 0.0
        %958 = vmatprep.subr.mxu0 0.0
        %959 = vmatpush1.msra.mxu0 0.0
        %960 = vmatprep.subr.mxu0 0.0
        %961 = vmatpush1.msra.mxu0 0.0
        %962 = vmatprep.subr.mxu0 0.0
        %963 = vmatpush1.msra.mxu0 0.0
        %964 = vmatprep.subr.mxu0 0.0
        %965 = vmatpush1.msra.mxu0 0.0
        %966 = vmatprep.subr.mxu0 0.0
        %967 = vmatpush1.msra.mxu0 0.0
        %968 = vmatprep.subr.mxu0 0.0
        %969 = vmatpush1.msra.mxu0 0.0
        %970 = vmatprep.subr.mxu0 0.0
        %971 = vmatpush1.msra.mxu0 0.0
        %972 = vmatprep.subr.mxu0 0.0
        %v973 = vand.u32 %v198, 4294901760
        %974 = vmatpush1.msra.mxu0 %v973
        %975 = vmatprep.subr.mxu0 0.0
        %v976 = vand.u32 %v197, 4294901760
        %977 = vmatpush1.msra.mxu0 %v976
        %978 = vmatprep.subr.mxu0 0.0
        %v979 = vand.u32 %v196, 4294901760
        %980 = vmatpush1.msra.mxu0 %v979
        %981 = vmatprep.subr.mxu0 0.0
        %v982 = vand.u32 %v195, 4294901760
        %983 = vmatpush1.msra.mxu0 %v982
        %984 = vmatprep.subr.mxu0 0.0
        %985 = vmatpush2.msra.mxu0 0.0
        %986 = vmatprep.subr.mxu0 0.0
        %987 = vmatpush2.msra.mxu0 0.0
        %988 = vmatprep.subr.mxu0 0.0
        %989 = vmatpush2.msra.mxu0 0.0
        %990 = vmatprep.subr.mxu0 0.0
        %991 = vmatpush2.msra.mxu0 0.0
        %992 = vmatprep.subr.mxu0 0.0
        %993 = vmatpush2.msra.mxu0 0.0
        %994 = vmatprep.subr.mxu0 0.0
        %995 = vmatpush2.msra.mxu0 0.0
        %996 = vmatprep.subr.mxu0 0.0
        %997 = vmatpush2.msra.mxu0 0.0
        %998 = vmatprep.subr.mxu0 0.0
        %999 = vmatpush2.msra.mxu0 0.0
        %1000 = vmatprep.subr.mxu0 0.0
        %1001 = vmatpush2.msra.mxu0 0.0
        %1002 = vmatprep.subr.mxu0 0.0
        %1003 = vmatpush2.msra.mxu0 0.0
        %1004 = vmatprep.subr.mxu0 0.0
        %1005 = vmatpush2.msra.mxu0 0.0
        %1006 = vmatprep.subr.mxu0 0.0
        %1007 = vmatpush2.msra.mxu0 0.0
        %1008 = vmatprep.subr.mxu0 0.0
        %1009 = vmatpush2.msra.mxu0 0.0
        %1010 = vmatprep.subr.mxu0 0.0
        %1011 = vmatpush2.msra.mxu0 0.0
        %1012 = vmatprep.subr.mxu0 0.0
        %1013 = vmatpush2.msra.mxu0 0.0
        %1014 = vmatprep.subr.mxu0 0.0
        %1015 = vmatpush2.msra.mxu0 0.0
        %1016 = vmatprep.mubr.f32.mxu0 0.0
        %v1017 = vand.u32 %v696, 4294901760
        %v1018 = vsub.f32 %v696, %v1017
        %v1019 = vand.u32 %v1018, 4294901760
        %1020 = vmatmul.mubr.f32.gmra.mxu0 %v1019
        %v1021 = vpop.f32.mrf.mxu0
        %v1022 = vadd.f32 %v945, %v1021
        %v1023 = vpop.f32.mrf.mxu0
        %1024 = vdwg.mxu0
        %1025 = vmatprep.subr.mxu0 0.0
        %1026 = vmatpush1.msra.mxu0 0.0
        %1027 = vmatprep.subr.mxu0 0.0
        %1028 = vmatpush1.msra.mxu0 0.0
        %1029 = vmatprep.subr.mxu0 0.0
        %1030 = vmatpush1.msra.mxu0 0.0
        %1031 = vmatprep.subr.mxu0 0.0
        %1032 = vmatpush1.msra.mxu0 0.0
        %1033 = vmatprep.subr.mxu0 0.0
        %1034 = vmatpush1.msra.mxu0 0.0
        %1035 = vmatprep.subr.mxu0 0.0
        %1036 = vmatpush1.msra.mxu0 0.0
        %1037 = vmatprep.subr.mxu0 0.0
        %1038 = vmatpush1.msra.mxu0 0.0
        %1039 = vmatprep.subr.mxu0 0.0
        %1040 = vmatpush1.msra.mxu0 0.0
        %1041 = vmatprep.subr.mxu0 0.0
        %1042 = vmatpush1.msra.mxu0 0.0
        %1043 = vmatprep.subr.mxu0 0.0
        %1044 = vmatpush1.msra.mxu0 0.0
        %1045 = vmatprep.subr.mxu0 0.0
        %1046 = vmatpush1.msra.mxu0 0.0
        %1047 = vmatprep.subr.mxu0 0.0
        %1048 = vmatpush1.msra.mxu0 0.0
        %1049 = vmatprep.subr.mxu0 0.0
        %v1050 = vand.u32 %v198, 4294901760
        %v1051 = vsub.f32 %v198, %v1050
        %v1052 = vand.u32 %v1051, 4294901760
        %1053 = vmatpush1.msra.mxu0 %v1052
        %1054 = vmatprep.subr.mxu0 0.0
        %v1055 = vand.u32 %v197, 4294901760
        %v1056 = vsub.f32 %v197, %v1055
        %v1057 = vand.u32 %v1056, 4294901760
        %1058 = vmatpush1.msra.mxu0 %v1057
        %1059 = vmatprep.subr.mxu0 0.0
        %v1060 = vand.u32 %v196, 4294901760
        %v1061 = vsub.f32 %v196, %v1060
        %v1062 = vand.u32 %v1061, 4294901760
        %1063 = vmatpush1.msra.mxu0 %v1062
        %1064 = vmatprep.subr.mxu0 0.0
        %v1065 = vand.u32 %v195, 4294901760
        %v1066 = vsub.f32 %v195, %v1065
        %v1067 = vand.u32 %v1066, 4294901760
        %1068 = vmatpush1.msra.mxu0 %v1067
        %1069 = vmatprep.subr.mxu0 0.0
        %1070 = vmatpush2.msra.mxu0 0.0
        %1071 = vmatprep.subr.mxu0 0.0
        %1072 = vmatpush2.msra.mxu0 0.0
        %1073 = vmatprep.subr.mxu0 0.0
        %1074 = vmatpush2.msra.mxu0 0.0
        %1075 = vmatprep.subr.mxu0 0.0
        %1076 = vmatpush2.msra.mxu0 0.0
        %1077 = vmatprep.subr.mxu0 0.0
        %1078 = vmatpush2.msra.mxu0 0.0
        %1079 = vmatprep.subr.mxu0 0.0
        %1080 = vmatpush2.msra.mxu0 0.0
        %1081 = vmatprep.subr.mxu0 0.0
        %1082 = vmatpush2.msra.mxu0 0.0
        %1083 = vmatprep.subr.mxu0 0.0
        %1084 = vmatpush2.msra.mxu0 0.0
        %1085 = vmatprep.subr.mxu0 0.0
        %1086 = vmatpush2.msra.mxu0 0.0
        %1087 = vmatprep.subr.mxu0 0.0
        %1088 = vmatpush2.msra.mxu0 0.0
        %1089 = vmatprep.subr.mxu0 0.0
        %1090 = vmatpush2.msra.mxu0 0.0
        %1091 = vmatprep.subr.mxu0 0.0
        %1092 = vmatpush2.msra.mxu0 0.0
        %1093 = vmatprep.subr.mxu0 0.0
        %1094 = vmatpush2.msra.mxu0 0.0
        %1095 = vmatprep.subr.mxu0 0.0
        %1096 = vmatpush2.msra.mxu0 0.0
        %1097 = vmatprep.subr.mxu0 0.0
        %1098 = vmatpush2.msra.mxu0 0.0
        %1099 = vmatprep.subr.mxu0 0.0
        %1100 = vmatpush2.msra.mxu0 0.0
        %1101 = vmatprep.mubr.f32.mxu0 0.0
        %v1102 = vand.u32 %v696, 4294901760
        %1103 = vmatmul.mubr.f32.gmra.mxu0 %v1102
        %v1104 = vpop.f32.mrf.mxu0
        %v1105 = vadd.f32 %v1022, %v1104
        %v1106 = vpop.f32.mrf.mxu0
        %1107 = vdwg.mxu0
        %1108 = vmatprep.subr.mxu0 0.0
        %1109 = vmatpush1.msra.mxu0 0.0
        %1110 = vmatprep.subr.mxu0 0.0
        %1111 = vmatpush1.msra.mxu0 0.0
        %1112 = vmatprep.subr.mxu0 0.0
        %1113 = vmatpush1.msra.mxu0 0.0
        %1114 = vmatprep.subr.mxu0 0.0
        %1115 = vmatpush1.msra.mxu0 0.0
        %1116 = vmatprep.subr.mxu0 0.0
        %1117 = vmatpush1.msra.mxu0 0.0
        %1118 = vmatprep.subr.mxu0 0.0
        %1119 = vmatpush1.msra.mxu0 0.0
        %1120 = vmatprep.subr.mxu0 0.0
        %1121 = vmatpush1.msra.mxu0 0.0
        %1122 = vmatprep.subr.mxu0 0.0
        %1123 = vmatpush1.msra.mxu0 0.0
        %1124 = vmatprep.subr.mxu0 0.0
        %1125 = vmatpush1.msra.mxu0 0.0
        %1126 = vmatprep.subr.mxu0 0.0
        %1127 = vmatpush1.msra.mxu0 0.0
        %1128 = vmatprep.subr.mxu0 0.0
        %1129 = vmatpush1.msra.mxu0 0.0
        %1130 = vmatprep.subr.mxu0 0.0
        %1131 = vmatpush1.msra.mxu0 0.0
        %1132 = vmatprep.subr.mxu0 0.0
        %v1133 = vand.u32 %v198, 4294901760
        %1134 = vmatpush1.msra.mxu0 %v1133
        %1135 = vmatprep.subr.mxu0 0.0
        %v1136 = vand.u32 %v197, 4294901760
        %1137 = vmatpush1.msra.mxu0 %v1136
        %1138 = vmatprep.subr.mxu0 0.0
        %v1139 = vand.u32 %v196, 4294901760
        %1140 = vmatpush1.msra.mxu0 %v1139
        %1141 = vmatprep.subr.mxu0 0.0
        %v1142 = vand.u32 %v195, 4294901760
        %1143 = vmatpush1.msra.mxu0 %v1142
        %1144 = vmatprep.subr.mxu0 0.0
        %1145 = vmatpush2.msra.mxu0 0.0
        %1146 = vmatprep.subr.mxu0 0.0
        %1147 = vmatpush2.msra.mxu0 0.0
        %1148 = vmatprep.subr.mxu0 0.0
        %1149 = vmatpush2.msra.mxu0 0.0
        %1150 = vmatprep.subr.mxu0 0.0
        %1151 = vmatpush2.msra.mxu0 0.0
        %1152 = vmatprep.subr.mxu0 0.0
        %1153 = vmatpush2.msra.mxu0 0.0
        %1154 = vmatprep.subr.mxu0 0.0
        %1155 = vmatpush2.msra.mxu0 0.0
        %1156 = vmatprep.subr.mxu0 0.0
        %1157 = vmatpush2.msra.mxu0 0.0
        %1158 = vmatprep.subr.mxu0 0.0
        %1159 = vmatpush2.msra.mxu0 0.0
        %1160 = vmatprep.subr.mxu0 0.0
        %1161 = vmatpush2.msra.mxu0 0.0
        %1162 = vmatprep.subr.mxu0 0.0
        %1163 = vmatpush2.msra.mxu0 0.0
        %1164 = vmatprep.subr.mxu0 0.0
        %1165 = vmatpush2.msra.mxu0 0.0
        %1166 = vmatprep.subr.mxu0 0.0
        %1167 = vmatpush2.msra.mxu0 0.0
        %1168 = vmatprep.subr.mxu0 0.0
        %1169 = vmatpush2.msra.mxu0 0.0
        %1170 = vmatprep.subr.mxu0 0.0
        %1171 = vmatpush2.msra.mxu0 0.0
        %1172 = vmatprep.subr.mxu0 0.0
        %1173 = vmatpush2.msra.mxu0 0.0
        %1174 = vmatprep.subr.mxu0 0.0
        %1175 = vmatpush2.msra.mxu0 0.0
        %1176 = vmatprep.mubr.f32.mxu0 0.0
        %v1177 = vand.u32 %v696, 4294901760
        %1178 = vmatmul.mubr.f32.gmra.mxu0 %v1177
        %v1179 = vpop.f32.mrf.mxu0
        %v1180 = vadd.f32 %v1105, %v1179
        %v1181 = vpop.f32.mrf.mxu0
        %1182 = vdwg.mxu0
        %s1183 = scalar_lea.vmem %s169, 16 [#allocation2]
        %v1184 = vld [vmem:[%s1183] sm:$0xff]
        %s1185 = scalar_lea.vmem [#allocation5], 64
        %v1186 = vld [vmem:[%s1185] sm:$0xff]
        %v1187 = vld [vmem:[%s1185 + $0x8] sm:$0xff]
        %v1188 = vld [vmem:[%s1185 + $0x10] sm:$0xff]
        %v1189 = vld [vmem:[%s1185 + $0x18] sm:$0xff]
        %v1191 = vsel %vm206, %v1184, 0
        %1193 = vmatprep.subr.mxu0 0.0
        %1194 = vmatpush1.msra.mxu0 0.0
        %1195 = vmatprep.subr.mxu0 0.0
        %1196 = vmatpush1.msra.mxu0 0.0
        %1197 = vmatprep.subr.mxu0 0.0
        %1198 = vmatpush1.msra.mxu0 0.0
        %1199 = vmatprep.subr.mxu0 0.0
        %1200 = vmatpush1.msra.mxu0 0.0
        %1201 = vmatprep.subr.mxu0 0.0
        %1202 = vmatpush1.msra.mxu0 0.0
        %1203 = vmatprep.subr.mxu0 0.0
        %1204 = vmatpush1.msra.mxu0 0.0
        %1205 = vmatprep.subr.mxu0 0.0
        %1206 = vmatpush1.msra.mxu0 0.0
        %1207 = vmatprep.subr.mxu0 0.0
        %1208 = vmatpush1.msra.mxu0 0.0
        %1209 = vmatprep.subr.mxu0 0.0
        %1210 = vmatpush1.msra.mxu0 0.0
        %1211 = vmatprep.subr.mxu0 0.0
        %1212 = vmatpush1.msra.mxu0 0.0
        %1213 = vmatprep.subr.mxu0 0.0
        %1214 = vmatpush1.msra.mxu0 0.0
        %1215 = vmatprep.subr.mxu0 0.0
        %1216 = vmatpush1.msra.mxu0 0.0
        %1217 = vmatprep.subr.mxu0 0.0
        %v1218 = vand.u32 %v1189, 4294901760
        %1219 = vmatpush1.msra.mxu0 %v1218
        %1220 = vmatprep.subr.mxu0 0.0
        %v1221 = vand.u32 %v1188, 4294901760
        %1222 = vmatpush1.msra.mxu0 %v1221
        %1223 = vmatprep.subr.mxu0 0.0
        %v1224 = vand.u32 %v1187, 4294901760
        %1225 = vmatpush1.msra.mxu0 %v1224
        %1226 = vmatprep.subr.mxu0 0.0
        %v1227 = vand.u32 %v1186, 4294901760
        %1228 = vmatpush1.msra.mxu0 %v1227
        %1229 = vmatprep.subr.mxu0 0.0
        %1230 = vmatpush2.msra.mxu0 0.0
        %1231 = vmatprep.subr.mxu0 0.0
        %1232 = vmatpush2.msra.mxu0 0.0
        %1233 = vmatprep.subr.mxu0 0.0
        %1234 = vmatpush2.msra.mxu0 0.0
        %1235 = vmatprep.subr.mxu0 0.0
        %1236 = vmatpush2.msra.mxu0 0.0
        %1237 = vmatprep.subr.mxu0 0.0
        %1238 = vmatpush2.msra.mxu0 0.0
        %1239 = vmatprep.subr.mxu0 0.0
        %1240 = vmatpush2.msra.mxu0 0.0
        %1241 = vmatprep.subr.mxu0 0.0
        %1242 = vmatpush2.msra.mxu0 0.0
        %1243 = vmatprep.subr.mxu0 0.0
        %1244 = vmatpush2.msra.mxu0 0.0
        %1245 = vmatprep.subr.mxu0 0.0
        %1246 = vmatpush2.msra.mxu0 0.0
        %1247 = vmatprep.subr.mxu0 0.0
        %1248 = vmatpush2.msra.mxu0 0.0
        %1249 = vmatprep.subr.mxu0 0.0
        %1250 = vmatpush2.msra.mxu0 0.0
        %1251 = vmatprep.subr.mxu0 0.0
        %1252 = vmatpush2.msra.mxu0 0.0
        %1253 = vmatprep.subr.mxu0 0.0
        %1254 = vmatpush2.msra.mxu0 0.0
        %1255 = vmatprep.subr.mxu0 0.0
        %1256 = vmatpush2.msra.mxu0 0.0
        %1257 = vmatprep.subr.mxu0 0.0
        %1258 = vmatpush2.msra.mxu0 0.0
        %1259 = vmatprep.subr.mxu0 0.0
        %1260 = vmatpush2.msra.mxu0 0.0
        %1261 = vmatprep.mubr.f32.mxu0 0.0
        %v1262 = vand.u32 %v1191, 4294901760
        %v1263 = vsub.f32 %v1191, %v1262
        %v1264 = vand.u32 %v1263, 4294901760
        %v1265 = vsub.f32 %v1263, %v1264
        %v1266 = vand.u32 %v1265, 4294901760
        %1267 = vmatmul.mubr.f32.gmra.mxu0 %v1266
        %v1268 = vpop.f32.mrf.mxu0
        %v1269 = vadd.f32 0.0, %v1268
        %v1270 = vpop.f32.mrf.mxu0
        %1271 = vdwg.mxu0
        %1272 = vmatprep.subr.mxu0 0.0
        %1273 = vmatpush1.msra.mxu0 0.0
        %1274 = vmatprep.subr.mxu0 0.0
        %1275 = vmatpush1.msra.mxu0 0.0
        %1276 = vmatprep.subr.mxu0 0.0
        %1277 = vmatpush1.msra.mxu0 0.0
        %1278 = vmatprep.subr.mxu0 0.0
        %1279 = vmatpush1.msra.mxu0 0.0
        %1280 = vmatprep.subr.mxu0 0.0
        %1281 = vmatpush1.msra.mxu0 0.0
        %1282 = vmatprep.subr.mxu0 0.0
        %1283 = vmatpush1.msra.mxu0 0.0
        %1284 = vmatprep.subr.mxu0 0.0
        %1285 = vmatpush1.msra.mxu0 0.0
        %1286 = vmatprep.subr.mxu0 0.0
        %1287 = vmatpush1.msra.mxu0 0.0
        %1288 = vmatprep.subr.mxu0 0.0
        %1289 = vmatpush1.msra.mxu0 0.0
        %1290 = vmatprep.subr.mxu0 0.0
        %1291 = vmatpush1.msra.mxu0 0.0
        %1292 = vmatprep.subr.mxu0 0.0
        %1293 = vmatpush1.msra.mxu0 0.0
        %1294 = vmatprep.subr.mxu0 0.0
        %1295 = vmatpush1.msra.mxu0 0.0
        %1296 = vmatprep.subr.mxu0 0.0
        %v1297 = vand.u32 %v1189, 4294901760
        %v1298 = vsub.f32 %v1189, %v1297
        %v1299 = vand.u32 %v1298, 4294901760
        %v1300 = vsub.f32 %v1298, %v1299
        %v1301 = vand.u32 %v1300, 4294901760
        %1302 = vmatpush1.msra.mxu0 %v1301
        %1303 = vmatprep.subr.mxu0 0.0
        %v1304 = vand.u32 %v1188, 4294901760
        %v1305 = vsub.f32 %v1188, %v1304
        %v1306 = vand.u32 %v1305, 4294901760
        %v1307 = vsub.f32 %v1305, %v1306
        %v1308 = vand.u32 %v1307, 4294901760
        %1309 = vmatpush1.msra.mxu0 %v1308
        %1310 = vmatprep.subr.mxu0 0.0
        %v1311 = vand.u32 %v1187, 4294901760
        %v1312 = vsub.f32 %v1187, %v1311
        %v1313 = vand.u32 %v1312, 4294901760
        %v1314 = vsub.f32 %v1312, %v1313
        %v1315 = vand.u32 %v1314, 4294901760
        %1316 = vmatpush1.msra.mxu0 %v1315
        %1317 = vmatprep.subr.mxu0 0.0
        %v1318 = vand.u32 %v1186, 4294901760
        %v1319 = vsub.f32 %v1186, %v1318
        %v1320 = vand.u32 %v1319, 4294901760
        %v1321 = vsub.f32 %v1319, %v1320
        %v1322 = vand.u32 %v1321, 4294901760
        %1323 = vmatpush1.msra.mxu0 %v1322
        %1324 = vmatprep.subr.mxu0 0.0
        %1325 = vmatpush2.msra.mxu0 0.0
        %1326 = vmatprep.subr.mxu0 0.0
        %1327 = vmatpush2.msra.mxu0 0.0
        %1328 = vmatprep.subr.mxu0 0.0
        %1329 = vmatpush2.msra.mxu0 0.0
        %1330 = vmatprep.subr.mxu0 0.0
        %1331 = vmatpush2.msra.mxu0 0.0
        %1332 = vmatprep.subr.mxu0 0.0
        %1333 = vmatpush2.msra.mxu0 0.0
        %1334 = vmatprep.subr.mxu0 0.0
        %1335 = vmatpush2.msra.mxu0 0.0
        %1336 = vmatprep.subr.mxu0 0.0
        %1337 = vmatpush2.msra.mxu0 0.0
        %1338 = vmatprep.subr.mxu0 0.0
        %1339 = vmatpush2.msra.mxu0 0.0
        %1340 = vmatprep.subr.mxu0 0.0
        %1341 = vmatpush2.msra.mxu0 0.0
        %1342 = vmatprep.subr.mxu0 0.0
        %1343 = vmatpush2.msra.mxu0 0.0
        %1344 = vmatprep.subr.mxu0 0.0
        %1345 = vmatpush2.msra.mxu0 0.0
        %1346 = vmatprep.subr.mxu0 0.0
        %1347 = vmatpush2.msra.mxu0 0.0
        %1348 = vmatprep.subr.mxu0 0.0
        %1349 = vmatpush2.msra.mxu0 0.0
        %1350 = vmatprep.subr.mxu0 0.0
        %1351 = vmatpush2.msra.mxu0 0.0
        %1352 = vmatprep.subr.mxu0 0.0
        %1353 = vmatpush2.msra.mxu0 0.0
        %1354 = vmatprep.subr.mxu0 0.0
        %1355 = vmatpush2.msra.mxu0 0.0
        %1356 = vmatprep.mubr.f32.mxu0 0.0
        %v1357 = vand.u32 %v1191, 4294901760
        %1358 = vmatmul.mubr.f32.gmra.mxu0 %v1357
        %v1359 = vpop.f32.mrf.mxu0
        %v1360 = vadd.f32 %v1269, %v1359
        %v1361 = vpop.f32.mrf.mxu0
        %1362 = vdwg.mxu0
        %1363 = vmatprep.subr.mxu0 0.0
        %1364 = vmatpush1.msra.mxu0 0.0
        %1365 = vmatprep.subr.mxu0 0.0
        %1366 = vmatpush1.msra.mxu0 0.0
        %1367 = vmatprep.subr.mxu0 0.0
        %1368 = vmatpush1.msra.mxu0 0.0
        %1369 = vmatprep.subr.mxu0 0.0
        %1370 = vmatpush1.msra.mxu0 0.0
        %1371 = vmatprep.subr.mxu0 0.0
        %1372 = vmatpush1.msra.mxu0 0.0
        %1373 = vmatprep.subr.mxu0 0.0
        %1374 = vmatpush1.msra.mxu0 0.0
        %1375 = vmatprep.subr.mxu0 0.0
        %1376 = vmatpush1.msra.mxu0 0.0
        %1377 = vmatprep.subr.mxu0 0.0
        %1378 = vmatpush1.msra.mxu0 0.0
        %1379 = vmatprep.subr.mxu0 0.0
        %1380 = vmatpush1.msra.mxu0 0.0
        %1381 = vmatprep.subr.mxu0 0.0
        %1382 = vmatpush1.msra.mxu0 0.0
        %1383 = vmatprep.subr.mxu0 0.0
        %1384 = vmatpush1.msra.mxu0 0.0
        %1385 = vmatprep.subr.mxu0 0.0
        %1386 = vmatpush1.msra.mxu0 0.0
        %1387 = vmatprep.subr.mxu0 0.0
        %v1388 = vand.u32 %v1189, 4294901760
        %v1389 = vsub.f32 %v1189, %v1388
        %1390 = vmatpush1.msra.mxu0 %v1389
        %1391 = vmatprep.subr.mxu0 0.0
        %v1392 = vand.u32 %v1188, 4294901760
        %v1393 = vsub.f32 %v1188, %v1392
        %1394 = vmatpush1.msra.mxu0 %v1393
        %1395 = vmatprep.subr.mxu0 0.0
        %v1396 = vand.u32 %v1187, 4294901760
        %v1397 = vsub.f32 %v1187, %v1396
        %1398 = vmatpush1.msra.mxu0 %v1397
        %1399 = vmatprep.subr.mxu0 0.0
        %v1400 = vand.u32 %v1186, 4294901760
        %v1401 = vsub.f32 %v1186, %v1400
        %1402 = vmatpush1.msra.mxu0 %v1401
        %1403 = vmatprep.subr.mxu0 0.0
        %1404 = vmatpush2.msra.mxu0 0.0
        %1405 = vmatprep.subr.mxu0 0.0
        %1406 = vmatpush2.msra.mxu0 0.0
        %1407 = vmatprep.subr.mxu0 0.0
        %1408 = vmatpush2.msra.mxu0 0.0
        %1409 = vmatprep.subr.mxu0 0.0
        %1410 = vmatpush2.msra.mxu0 0.0
        %1411 = vmatprep.subr.mxu0 0.0
        %1412 = vmatpush2.msra.mxu0 0.0
        %1413 = vmatprep.subr.mxu0 0.0
        %1414 = vmatpush2.msra.mxu0 0.0
        %1415 = vmatprep.subr.mxu0 0.0
        %1416 = vmatpush2.msra.mxu0 0.0
        %1417 = vmatprep.subr.mxu0 0.0
        %1418 = vmatpush2.msra.mxu0 0.0
        %1419 = vmatprep.subr.mxu0 0.0
        %1420 = vmatpush2.msra.mxu0 0.0
        %1421 = vmatprep.subr.mxu0 0.0
        %1422 = vmatpush2.msra.mxu0 0.0
        %1423 = vmatprep.subr.mxu0 0.0
        %1424 = vmatpush2.msra.mxu0 0.0
        %1425 = vmatprep.subr.mxu0 0.0
        %1426 = vmatpush2.msra.mxu0 0.0
        %1427 = vmatprep.subr.mxu0 0.0
        %1428 = vmatpush2.msra.mxu0 0.0
        %1429 = vmatprep.subr.mxu0 0.0
        %1430 = vmatpush2.msra.mxu0 0.0
        %1431 = vmatprep.subr.mxu0 0.0
        %1432 = vmatpush2.msra.mxu0 0.0
        %1433 = vmatprep.subr.mxu0 0.0
        %1434 = vmatpush2.msra.mxu0 0.0
        %1435 = vmatprep.mubr.f32.mxu0 0.0
        %v1436 = vand.u32 %v1191, 4294901760
        %v1437 = vsub.f32 %v1191, %v1436
        %1438 = vmatmul.mubr.f32.gmra.mxu0 %v1437
        %v1439 = vpop.f32.mrf.mxu0
        %v1440 = vadd.f32 %v1360, %v1439
        %v1441 = vpop.f32.mrf.mxu0
        %1442 = vdwg.mxu0
        %1443 = vmatprep.subr.mxu0 0.0
        %1444 = vmatpush1.msra.mxu0 0.0
        %1445 = vmatprep.subr.mxu0 0.0
        %1446 = vmatpush1.msra.mxu0 0.0
        %1447 = vmatprep.subr.mxu0 0.0
        %1448 = vmatpush1.msra.mxu0 0.0
        %1449 = vmatprep.subr.mxu0 0.0
        %1450 = vmatpush1.msra.mxu0 0.0
        %1451 = vmatprep.subr.mxu0 0.0
        %1452 = vmatpush1.msra.mxu0 0.0
        %1453 = vmatprep.subr.mxu0 0.0
        %1454 = vmatpush1.msra.mxu0 0.0
        %1455 = vmatprep.subr.mxu0 0.0
        %1456 = vmatpush1.msra.mxu0 0.0
        %1457 = vmatprep.subr.mxu0 0.0
        %1458 = vmatpush1.msra.mxu0 0.0
        %1459 = vmatprep.subr.mxu0 0.0
        %1460 = vmatpush1.msra.mxu0 0.0
        %1461 = vmatprep.subr.mxu0 0.0
        %1462 = vmatpush1.msra.mxu0 0.0
        %1463 = vmatprep.subr.mxu0 0.0
        %1464 = vmatpush1.msra.mxu0 0.0
        %1465 = vmatprep.subr.mxu0 0.0
        %1466 = vmatpush1.msra.mxu0 0.0
        %1467 = vmatprep.subr.mxu0 0.0
        %v1468 = vand.u32 %v1189, 4294901760
        %1469 = vmatpush1.msra.mxu0 %v1468
        %1470 = vmatprep.subr.mxu0 0.0
        %v1471 = vand.u32 %v1188, 4294901760
        %1472 = vmatpush1.msra.mxu0 %v1471
        %1473 = vmatprep.subr.mxu0 0.0
        %v1474 = vand.u32 %v1187, 4294901760
        %1475 = vmatpush1.msra.mxu0 %v1474
        %1476 = vmatprep.subr.mxu0 0.0
        %v1477 = vand.u32 %v1186, 4294901760
        %1478 = vmatpush1.msra.mxu0 %v1477
        %1479 = vmatprep.subr.mxu0 0.0
        %1480 = vmatpush2.msra.mxu0 0.0
        %1481 = vmatprep.subr.mxu0 0.0
        %1482 = vmatpush2.msra.mxu0 0.0
        %1483 = vmatprep.subr.mxu0 0.0
        %1484 = vmatpush2.msra.mxu0 0.0
        %1485 = vmatprep.subr.mxu0 0.0
        %1486 = vmatpush2.msra.mxu0 0.0
        %1487 = vmatprep.subr.mxu0 0.0
        %1488 = vmatpush2.msra.mxu0 0.0
        %1489 = vmatprep.subr.mxu0 0.0
        %1490 = vmatpush2.msra.mxu0 0.0
        %1491 = vmatprep.subr.mxu0 0.0
        %1492 = vmatpush2.msra.mxu0 0.0
        %1493 = vmatprep.subr.mxu0 0.0
        %1494 = vmatpush2.msra.mxu0 0.0
        %1495 = vmatprep.subr.mxu0 0.0
        %1496 = vmatpush2.msra.mxu0 0.0
        %1497 = vmatprep.subr.mxu0 0.0
        %1498 = vmatpush2.msra.mxu0 0.0
        %1499 = vmatprep.subr.mxu0 0.0
        %1500 = vmatpush2.msra.mxu0 0.0
        %1501 = vmatprep.subr.mxu0 0.0
        %1502 = vmatpush2.msra.mxu0 0.0
        %1503 = vmatprep.subr.mxu0 0.0
        %1504 = vmatpush2.msra.mxu0 0.0
        %1505 = vmatprep.subr.mxu0 0.0
        %1506 = vmatpush2.msra.mxu0 0.0
        %1507 = vmatprep.subr.mxu0 0.0
        %1508 = vmatpush2.msra.mxu0 0.0
        %1509 = vmatprep.subr.mxu0 0.0
        %1510 = vmatpush2.msra.mxu0 0.0
        %1511 = vmatprep.mubr.f32.mxu0 0.0
        %v1512 = vand.u32 %v1191, 4294901760
        %v1513 = vsub.f32 %v1191, %v1512
        %v1514 = vand.u32 %v1513, 4294901760
        %1515 = vmatmul.mubr.f32.gmra.mxu0 %v1514
        %v1516 = vpop.f32.mrf.mxu0
        %v1517 = vadd.f32 %v1440, %v1516
        %v1518 = vpop.f32.mrf.mxu0
        %1519 = vdwg.mxu0
        %1520 = vmatprep.subr.mxu0 0.0
        %1521 = vmatpush1.msra.mxu0 0.0
        %1522 = vmatprep.subr.mxu0 0.0
        %1523 = vmatpush1.msra.mxu0 0.0
        %1524 = vmatprep.subr.mxu0 0.0
        %1525 = vmatpush1.msra.mxu0 0.0
        %1526 = vmatprep.subr.mxu0 0.0
        %1527 = vmatpush1.msra.mxu0 0.0
        %1528 = vmatprep.subr.mxu0 0.0
        %1529 = vmatpush1.msra.mxu0 0.0
        %1530 = vmatprep.subr.mxu0 0.0
        %1531 = vmatpush1.msra.mxu0 0.0
        %1532 = vmatprep.subr.mxu0 0.0
        %1533 = vmatpush1.msra.mxu0 0.0
        %1534 = vmatprep.subr.mxu0 0.0
        %1535 = vmatpush1.msra.mxu0 0.0
        %1536 = vmatprep.subr.mxu0 0.0
        %1537 = vmatpush1.msra.mxu0 0.0
        %1538 = vmatprep.subr.mxu0 0.0
        %1539 = vmatpush1.msra.mxu0 0.0
        %1540 = vmatprep.subr.mxu0 0.0
        %1541 = vmatpush1.msra.mxu0 0.0
        %1542 = vmatprep.subr.mxu0 0.0
        %1543 = vmatpush1.msra.mxu0 0.0
        %1544 = vmatprep.subr.mxu0 0.0
        %v1545 = vand.u32 %v1189, 4294901760
        %v1546 = vsub.f32 %v1189, %v1545
        %v1547 = vand.u32 %v1546, 4294901760
        %1548 = vmatpush1.msra.mxu0 %v1547
        %1549 = vmatprep.subr.mxu0 0.0
        %v1550 = vand.u32 %v1188, 4294901760
        %v1551 = vsub.f32 %v1188, %v1550
        %v1552 = vand.u32 %v1551, 4294901760
        %1553 = vmatpush1.msra.mxu0 %v1552
        %1554 = vmatprep.subr.mxu0 0.0
        %v1555 = vand.u32 %v1187, 4294901760
        %v1556 = vsub.f32 %v1187, %v1555
        %v1557 = vand.u32 %v1556, 4294901760
        %1558 = vmatpush1.msra.mxu0 %v1557
        %1559 = vmatprep.subr.mxu0 0.0
        %v1560 = vand.u32 %v1186, 4294901760
        %v1561 = vsub.f32 %v1186, %v1560
        %v1562 = vand.u32 %v1561, 4294901760
        %1563 = vmatpush1.msra.mxu0 %v1562
        %1564 = vmatprep.subr.mxu0 0.0
        %1565 = vmatpush2.msra.mxu0 0.0
        %1566 = vmatprep.subr.mxu0 0.0
        %1567 = vmatpush2.msra.mxu0 0.0
        %1568 = vmatprep.subr.mxu0 0.0
        %1569 = vmatpush2.msra.mxu0 0.0
        %1570 = vmatprep.subr.mxu0 0.0
        %1571 = vmatpush2.msra.mxu0 0.0
        %1572 = vmatprep.subr.mxu0 0.0
        %1573 = vmatpush2.msra.mxu0 0.0
        %1574 = vmatprep.subr.mxu0 0.0
        %1575 = vmatpush2.msra.mxu0 0.0
        %1576 = vmatprep.subr.mxu0 0.0
        %1577 = vmatpush2.msra.mxu0 0.0
        %1578 = vmatprep.subr.mxu0 0.0
        %1579 = vmatpush2.msra.mxu0 0.0
        %1580 = vmatprep.subr.mxu0 0.0
        %1581 = vmatpush2.msra.mxu0 0.0
        %1582 = vmatprep.subr.mxu0 0.0
        %1583 = vmatpush2.msra.mxu0 0.0
        %1584 = vmatprep.subr.mxu0 0.0
        %1585 = vmatpush2.msra.mxu0 0.0
        %1586 = vmatprep.subr.mxu0 0.0
        %1587 = vmatpush2.msra.mxu0 0.0
        %1588 = vmatprep.subr.mxu0 0.0
        %1589 = vmatpush2.msra.mxu0 0.0
        %1590 = vmatprep.subr.mxu0 0.0
        %1591 = vmatpush2.msra.mxu0 0.0
        %1592 = vmatprep.subr.mxu0 0.0
        %1593 = vmatpush2.msra.mxu0 0.0
        %1594 = vmatprep.subr.mxu0 0.0
        %1595 = vmatpush2.msra.mxu0 0.0
        %1596 = vmatprep.mubr.f32.mxu0 0.0
        %v1597 = vand.u32 %v1191, 4294901760
        %1598 = vmatmul.mubr.f32.gmra.mxu0 %v1597
        %v1599 = vpop.f32.mrf.mxu0
        %v1600 = vadd.f32 %v1517, %v1599
        %v1601 = vpop.f32.mrf.mxu0
        %1602 = vdwg.mxu0
        %1603 = vmatprep.subr.mxu0 0.0
        %1604 = vmatpush1.msra.mxu0 0.0
        %1605 = vmatprep.subr.mxu0 0.0
        %1606 = vmatpush1.msra.mxu0 0.0
        %1607 = vmatprep.subr.mxu0 0.0
        %1608 = vmatpush1.msra.mxu0 0.0
        %1609 = vmatprep.subr.mxu0 0.0
        %1610 = vmatpush1.msra.mxu0 0.0
        %1611 = vmatprep.subr.mxu0 0.0
        %1612 = vmatpush1.msra.mxu0 0.0
        %1613 = vmatprep.subr.mxu0 0.0
        %1614 = vmatpush1.msra.mxu0 0.0
        %1615 = vmatprep.subr.mxu0 0.0
        %1616 = vmatpush1.msra.mxu0 0.0
        %1617 = vmatprep.subr.mxu0 0.0
        %1618 = vmatpush1.msra.mxu0 0.0
        %1619 = vmatprep.subr.mxu0 0.0
        %1620 = vmatpush1.msra.mxu0 0.0
        %1621 = vmatprep.subr.mxu0 0.0
        %1622 = vmatpush1.msra.mxu0 0.0
        %1623 = vmatprep.subr.mxu0 0.0
        %1624 = vmatpush1.msra.mxu0 0.0
        %1625 = vmatprep.subr.mxu0 0.0
        %1626 = vmatpush1.msra.mxu0 0.0
        %1627 = vmatprep.subr.mxu0 0.0
        %v1628 = vand.u32 %v1189, 4294901760
        %1629 = vmatpush1.msra.mxu0 %v1628
        %1630 = vmatprep.subr.mxu0 0.0
        %v1631 = vand.u32 %v1188, 4294901760
        %1632 = vmatpush1.msra.mxu0 %v1631
        %1633 = vmatprep.subr.mxu0 0.0
        %v1634 = vand.u32 %v1187, 4294901760
        %1635 = vmatpush1.msra.mxu0 %v1634
        %1636 = vmatprep.subr.mxu0 0.0
        %v1637 = vand.u32 %v1186, 4294901760
        %1638 = vmatpush1.msra.mxu0 %v1637
        %1639 = vmatprep.subr.mxu0 0.0
        %1640 = vmatpush2.msra.mxu0 0.0
        %1641 = vmatprep.subr.mxu0 0.0
        %1642 = vmatpush2.msra.mxu0 0.0
        %1643 = vmatprep.subr.mxu0 0.0
        %1644 = vmatpush2.msra.mxu0 0.0
        %1645 = vmatprep.subr.mxu0 0.0
        %1646 = vmatpush2.msra.mxu0 0.0
        %1647 = vmatprep.subr.mxu0 0.0
        %1648 = vmatpush2.msra.mxu0 0.0
        %1649 = vmatprep.subr.mxu0 0.0
        %1650 = vmatpush2.msra.mxu0 0.0
        %1651 = vmatprep.subr.mxu0 0.0
        %1652 = vmatpush2.msra.mxu0 0.0
        %1653 = vmatprep.subr.mxu0 0.0
        %1654 = vmatpush2.msra.mxu0 0.0
        %1655 = vmatprep.subr.mxu0 0.0
        %1656 = vmatpush2.msra.mxu0 0.0
        %1657 = vmatprep.subr.mxu0 0.0
        %1658 = vmatpush2.msra.mxu0 0.0
        %1659 = vmatprep.subr.mxu0 0.0
        %1660 = vmatpush2.msra.mxu0 0.0
        %1661 = vmatprep.subr.mxu0 0.0
        %1662 = vmatpush2.msra.mxu0 0.0
        %1663 = vmatprep.subr.mxu0 0.0
        %1664 = vmatpush2.msra.mxu0 0.0
        %1665 = vmatprep.subr.mxu0 0.0
        %1666 = vmatpush2.msra.mxu0 0.0
        %1667 = vmatprep.subr.mxu0 0.0
        %1668 = vmatpush2.msra.mxu0 0.0
        %1669 = vmatprep.subr.mxu0 0.0
        %1670 = vmatpush2.msra.mxu0 0.0
        %1671 = vmatprep.mubr.f32.mxu0 0.0
        %v1672 = vand.u32 %v1191, 4294901760
        %1673 = vmatmul.mubr.f32.gmra.mxu0 %v1672
        %v1674 = vpop.f32.mrf.mxu0
        %v1675 = vadd.f32 %v1600, %v1674
        %v1676 = vpop.f32.mrf.mxu0
        %1677 = vdwg.mxu0
        %v1678 = vadd.f32 %v1180, %v1675
        %s1679 = scalar_lea.vmem %s169, 24 [#allocation2]
        %v1680 = vld [vmem:[%s1679] sm:$0xff]
        %s1681 = scalar_lea.vmem [#allocation5], 96
        %v1682 = vld [vmem:[%s1681] sm:$0xff]
        %v1683 = vld [vmem:[%s1681 + $0x8] sm:$0xff]
        %v1684 = vld [vmem:[%s1681 + $0x10] sm:$0xff]
        %v1685 = vld [vmem:[%s1681 + $0x18] sm:$0xff]
        %v1687 = vsel %vm206, %v1680, 0
        %1689 = vmatprep.subr.mxu0 0.0
        %1690 = vmatpush1.msra.mxu0 0.0
        %1691 = vmatprep.subr.mxu0 0.0
        %1692 = vmatpush1.msra.mxu0 0.0
        %1693 = vmatprep.subr.mxu0 0.0
        %1694 = vmatpush1.msra.mxu0 0.0
        %1695 = vmatprep.subr.mxu0 0.0
        %1696 = vmatpush1.msra.mxu0 0.0
        %1697 = vmatprep.subr.mxu0 0.0
        %1698 = vmatpush1.msra.mxu0 0.0
        %1699 = vmatprep.subr.mxu0 0.0
        %1700 = vmatpush1.msra.mxu0 0.0
        %1701 = vmatprep.subr.mxu0 0.0
        %1702 = vmatpush1.msra.mxu0 0.0
        %1703 = vmatprep.subr.mxu0 0.0
        %1704 = vmatpush1.msra.mxu0 0.0
        %1705 = vmatprep.subr.mxu0 0.0
        %1706 = vmatpush1.msra.mxu0 0.0
        %1707 = vmatprep.subr.mxu0 0.0
        %1708 = vmatpush1.msra.mxu0 0.0
        %1709 = vmatprep.subr.mxu0 0.0
        %1710 = vmatpush1.msra.mxu0 0.0
        %1711 = vmatprep.subr.mxu0 0.0
        %1712 = vmatpush1.msra.mxu0 0.0
        %1713 = vmatprep.subr.mxu0 0.0
        %v1714 = vand.u32 %v1685, 4294901760
        %1715 = vmatpush1.msra.mxu0 %v1714
        %1716 = vmatprep.subr.mxu0 0.0
        %v1717 = vand.u32 %v1684, 4294901760
        %1718 = vmatpush1.msra.mxu0 %v1717
        %1719 = vmatprep.subr.mxu0 0.0
        %v1720 = vand.u32 %v1683, 4294901760
        %1721 = vmatpush1.msra.mxu0 %v1720
        %1722 = vmatprep.subr.mxu0 0.0
        %v1723 = vand.u32 %v1682, 4294901760
        %1724 = vmatpush1.msra.mxu0 %v1723
        %1725 = vmatprep.subr.mxu0 0.0
        %1726 = vmatpush2.msra.mxu0 0.0
        %1727 = vmatprep.subr.mxu0 0.0
        %1728 = vmatpush2.msra.mxu0 0.0
        %1729 = vmatprep.subr.mxu0 0.0
        %1730 = vmatpush2.msra.mxu0 0.0
        %1731 = vmatprep.subr.mxu0 0.0
        %1732 = vmatpush2.msra.mxu0 0.0
        %1733 = vmatprep.subr.mxu0 0.0
        %1734 = vmatpush2.msra.mxu0 0.0
        %1735 = vmatprep.subr.mxu0 0.0
        %1736 = vmatpush2.msra.mxu0 0.0
        %1737 = vmatprep.subr.mxu0 0.0
        %1738 = vmatpush2.msra.mxu0 0.0
        %1739 = vmatprep.subr.mxu0 0.0
        %1740 = vmatpush2.msra.mxu0 0.0
        %1741 = vmatprep.subr.mxu0 0.0
        %1742 = vmatpush2.msra.mxu0 0.0
        %1743 = vmatprep.subr.mxu0 0.0
        %1744 = vmatpush2.msra.mxu0 0.0
        %1745 = vmatprep.subr.mxu0 0.0
        %1746 = vmatpush2.msra.mxu0 0.0
        %1747 = vmatprep.subr.mxu0 0.0
        %1748 = vmatpush2.msra.mxu0 0.0
        %1749 = vmatprep.subr.mxu0 0.0
        %1750 = vmatpush2.msra.mxu0 0.0
        %1751 = vmatprep.subr.mxu0 0.0
        %1752 = vmatpush2.msra.mxu0 0.0
        %1753 = vmatprep.subr.mxu0 0.0
        %1754 = vmatpush2.msra.mxu0 0.0
        %1755 = vmatprep.subr.mxu0 0.0
        %1756 = vmatpush2.msra.mxu0 0.0
        %1757 = vmatprep.mubr.f32.mxu0 0.0
        %v1758 = vand.u32 %v1687, 4294901760
        %v1759 = vsub.f32 %v1687, %v1758
        %v1760 = vand.u32 %v1759, 4294901760
        %v1761 = vsub.f32 %v1759, %v1760
        %v1762 = vand.u32 %v1761, 4294901760
        %1763 = vmatmul.mubr.f32.gmra.mxu0 %v1762
        %v1764 = vpop.f32.mrf.mxu0
        %v1765 = vadd.f32 0.0, %v1764
        %v1766 = vpop.f32.mrf.mxu0
        %1767 = vdwg.mxu0
        %1768 = vmatprep.subr.mxu0 0.0
        %1769 = vmatpush1.msra.mxu0 0.0
        %1770 = vmatprep.subr.mxu0 0.0
        %1771 = vmatpush1.msra.mxu0 0.0
        %1772 = vmatprep.subr.mxu0 0.0
        %1773 = vmatpush1.msra.mxu0 0.0
        %1774 = vmatprep.subr.mxu0 0.0
        %1775 = vmatpush1.msra.mxu0 0.0
        %1776 = vmatprep.subr.mxu0 0.0
        %1777 = vmatpush1.msra.mxu0 0.0
        %1778 = vmatprep.subr.mxu0 0.0
        %1779 = vmatpush1.msra.mxu0 0.0
        %1780 = vmatprep.subr.mxu0 0.0
        %1781 = vmatpush1.msra.mxu0 0.0
        %1782 = vmatprep.subr.mxu0 0.0
        %1783 = vmatpush1.msra.mxu0 0.0
        %1784 = vmatprep.subr.mxu0 0.0
        %1785 = vmatpush1.msra.mxu0 0.0
        %1786 = vmatprep.subr.mxu0 0.0
        %1787 = vmatpush1.msra.mxu0 0.0
        %1788 = vmatprep.subr.mxu0 0.0
        %1789 = vmatpush1.msra.mxu0 0.0
        %1790 = vmatprep.subr.mxu0 0.0
        %1791 = vmatpush1.msra.mxu0 0.0
        %1792 = vmatprep.subr.mxu0 0.0
        %v1793 = vand.u32 %v1685, 4294901760
        %v1794 = vsub.f32 %v1685, %v1793
        %v1795 = vand.u32 %v1794, 4294901760
        %v1796 = vsub.f32 %v1794, %v1795
        %v1797 = vand.u32 %v1796, 4294901760
        %1798 = vmatpush1.msra.mxu0 %v1797
        %1799 = vmatprep.subr.mxu0 0.0
        %v1800 = vand.u32 %v1684, 4294901760
        %v1801 = vsub.f32 %v1684, %v1800
        %v1802 = vand.u32 %v1801, 4294901760
        %v1803 = vsub.f32 %v1801, %v1802
        %v1804 = vand.u32 %v1803, 4294901760
        %1805 = vmatpush1.msra.mxu0 %v1804
        %1806 = vmatprep.subr.mxu0 0.0
        %v1807 = vand.u32 %v1683, 4294901760
        %v1808 = vsub.f32 %v1683, %v1807
        %v1809 = vand.u32 %v1808, 4294901760
        %v1810 = vsub.f32 %v1808, %v1809
        %v1811 = vand.u32 %v1810, 4294901760
        %1812 = vmatpush1.msra.mxu0 %v1811
        %1813 = vmatprep.subr.mxu0 0.0
        %v1814 = vand.u32 %v1682, 4294901760
        %v1815 = vsub.f32 %v1682, %v1814
        %v1816 = vand.u32 %v1815, 4294901760
        %v1817 = vsub.f32 %v1815, %v1816
        %v1818 = vand.u32 %v1817, 4294901760
        %1819 = vmatpush1.msra.mxu0 %v1818
        %1820 = vmatprep.subr.mxu0 0.0
        %1821 = vmatpush2.msra.mxu0 0.0
        %1822 = vmatprep.subr.mxu0 0.0
        %1823 = vmatpush2.msra.mxu0 0.0
        %1824 = vmatprep.subr.mxu0 0.0
        %1825 = vmatpush2.msra.mxu0 0.0
        %1826 = vmatprep.subr.mxu0 0.0
        %1827 = vmatpush2.msra.mxu0 0.0
        %1828 = vmatprep.subr.mxu0 0.0
        %1829 = vmatpush2.msra.mxu0 0.0
        %1830 = vmatprep.subr.mxu0 0.0
        %1831 = vmatpush2.msra.mxu0 0.0
        %1832 = vmatprep.subr.mxu0 0.0
        %1833 = vmatpush2.msra.mxu0 0.0
        %1834 = vmatprep.subr.mxu0 0.0
        %1835 = vmatpush2.msra.mxu0 0.0
        %1836 = vmatprep.subr.mxu0 0.0
        %1837 = vmatpush2.msra.mxu0 0.0
        %1838 = vmatprep.subr.mxu0 0.0
        %1839 = vmatpush2.msra.mxu0 0.0
        %1840 = vmatprep.subr.mxu0 0.0
        %1841 = vmatpush2.msra.mxu0 0.0
        %1842 = vmatprep.subr.mxu0 0.0
        %1843 = vmatpush2.msra.mxu0 0.0
        %1844 = vmatprep.subr.mxu0 0.0
        %1845 = vmatpush2.msra.mxu0 0.0
        %1846 = vmatprep.subr.mxu0 0.0
        %1847 = vmatpush2.msra.mxu0 0.0
        %1848 = vmatprep.subr.mxu0 0.0
        %1849 = vmatpush2.msra.mxu0 0.0
        %1850 = vmatprep.subr.mxu0 0.0
        %1851 = vmatpush2.msra.mxu0 0.0
        %1852 = vmatprep.mubr.f32.mxu0 0.0
        %v1853 = vand.u32 %v1687, 4294901760
        %1854 = vmatmul.mubr.f32.gmra.mxu0 %v1853
        %v1855 = vpop.f32.mrf.mxu0
        %v1856 = vadd.f32 %v1765, %v1855
        %v1857 = vpop.f32.mrf.mxu0
        %1858 = vdwg.mxu0
        %1859 = vmatprep.subr.mxu0 0.0
        %1860 = vmatpush1.msra.mxu0 0.0
        %1861 = vmatprep.subr.mxu0 0.0
        %1862 = vmatpush1.msra.mxu0 0.0
        %1863 = vmatprep.subr.mxu0 0.0
        %1864 = vmatpush1.msra.mxu0 0.0
        %1865 = vmatprep.subr.mxu0 0.0
        %1866 = vmatpush1.msra.mxu0 0.0
        %1867 = vmatprep.subr.mxu0 0.0
        %1868 = vmatpush1.msra.mxu0 0.0
        %1869 = vmatprep.subr.mxu0 0.0
        %1870 = vmatpush1.msra.mxu0 0.0
        %1871 = vmatprep.subr.mxu0 0.0
        %1872 = vmatpush1.msra.mxu0 0.0
        %1873 = vmatprep.subr.mxu0 0.0
        %1874 = vmatpush1.msra.mxu0 0.0
        %1875 = vmatprep.subr.mxu0 0.0
        %1876 = vmatpush1.msra.mxu0 0.0
        %1877 = vmatprep.subr.mxu0 0.0
        %1878 = vmatpush1.msra.mxu0 0.0
        %1879 = vmatprep.subr.mxu0 0.0
        %1880 = vmatpush1.msra.mxu0 0.0
        %1881 = vmatprep.subr.mxu0 0.0
        %1882 = vmatpush1.msra.mxu0 0.0
        %1883 = vmatprep.subr.mxu0 0.0
        %v1884 = vand.u32 %v1685, 4294901760
        %v1885 = vsub.f32 %v1685, %v1884
        %1886 = vmatpush1.msra.mxu0 %v1885
        %1887 = vmatprep.subr.mxu0 0.0
        %v1888 = vand.u32 %v1684, 4294901760
        %v1889 = vsub.f32 %v1684, %v1888
        %1890 = vmatpush1.msra.mxu0 %v1889
        %1891 = vmatprep.subr.mxu0 0.0
        %v1892 = vand.u32 %v1683, 4294901760
        %v1893 = vsub.f32 %v1683, %v1892
        %1894 = vmatpush1.msra.mxu0 %v1893
        %1895 = vmatprep.subr.mxu0 0.0
        %v1896 = vand.u32 %v1682, 4294901760
        %v1897 = vsub.f32 %v1682, %v1896
        %1898 = vmatpush1.msra.mxu0 %v1897
        %1899 = vmatprep.subr.mxu0 0.0
        %1900 = vmatpush2.msra.mxu0 0.0
        %1901 = vmatprep.subr.mxu0 0.0
        %1902 = vmatpush2.msra.mxu0 0.0
        %1903 = vmatprep.subr.mxu0 0.0
        %1904 = vmatpush2.msra.mxu0 0.0
        %1905 = vmatprep.subr.mxu0 0.0
        %1906 = vmatpush2.msra.mxu0 0.0
        %1907 = vmatprep.subr.mxu0 0.0
        %1908 = vmatpush2.msra.mxu0 0.0
        %1909 = vmatprep.subr.mxu0 0.0
        %1910 = vmatpush2.msra.mxu0 0.0
        %1911 = vmatprep.subr.mxu0 0.0
        %1912 = vmatpush2.msra.mxu0 0.0
        %1913 = vmatprep.subr.mxu0 0.0
        %1914 = vmatpush2.msra.mxu0 0.0
        %1915 = vmatprep.subr.mxu0 0.0
        %1916 = vmatpush2.msra.mxu0 0.0
        %1917 = vmatprep.subr.mxu0 0.0
        %1918 = vmatpush2.msra.mxu0 0.0
        %1919 = vmatprep.subr.mxu0 0.0
        %1920 = vmatpush2.msra.mxu0 0.0
        %1921 = vmatprep.subr.mxu0 0.0
        %1922 = vmatpush2.msra.mxu0 0.0
        %1923 = vmatprep.subr.mxu0 0.0
        %1924 = vmatpush2.msra.mxu0 0.0
        %1925 = vmatprep.subr.mxu0 0.0
        %1926 = vmatpush2.msra.mxu0 0.0
        %1927 = vmatprep.subr.mxu0 0.0
        %1928 = vmatpush2.msra.mxu0 0.0
        %1929 = vmatprep.subr.mxu0 0.0
        %1930 = vmatpush2.msra.mxu0 0.0
        %1931 = vmatprep.mubr.f32.mxu0 0.0
        %v1932 = vand.u32 %v1687, 4294901760
        %v1933 = vsub.f32 %v1687, %v1932
        %1934 = vmatmul.mubr.f32.gmra.mxu0 %v1933
        %v1935 = vpop.f32.mrf.mxu0
        %v1936 = vadd.f32 %v1856, %v1935
        %v1937 = vpop.f32.mrf.mxu0
        %1938 = vdwg.mxu0
        %1939 = vmatprep.subr.mxu0 0.0
        %1940 = vmatpush1.msra.mxu0 0.0
        %1941 = vmatprep.subr.mxu0 0.0
        %1942 = vmatpush1.msra.mxu0 0.0
        %1943 = vmatprep.subr.mxu0 0.0
        %1944 = vmatpush1.msra.mxu0 0.0
        %1945 = vmatprep.subr.mxu0 0.0
        %1946 = vmatpush1.msra.mxu0 0.0
        %1947 = vmatprep.subr.mxu0 0.0
        %1948 = vmatpush1.msra.mxu0 0.0
        %1949 = vmatprep.subr.mxu0 0.0
        %1950 = vmatpush1.msra.mxu0 0.0
        %1951 = vmatprep.subr.mxu0 0.0
        %1952 = vmatpush1.msra.mxu0 0.0
        %1953 = vmatprep.subr.mxu0 0.0
        %1954 = vmatpush1.msra.mxu0 0.0
        %1955 = vmatprep.subr.mxu0 0.0
        %1956 = vmatpush1.msra.mxu0 0.0
        %1957 = vmatprep.subr.mxu0 0.0
        %1958 = vmatpush1.msra.mxu0 0.0
        %1959 = vmatprep.subr.mxu0 0.0
        %1960 = vmatpush1.msra.mxu0 0.0
        %1961 = vmatprep.subr.mxu0 0.0
        %1962 = vmatpush1.msra.mxu0 0.0
        %1963 = vmatprep.subr.mxu0 0.0
        %v1964 = vand.u32 %v1685, 4294901760
        %1965 = vmatpush1.msra.mxu0 %v1964
        %1966 = vmatprep.subr.mxu0 0.0
        %v1967 = vand.u32 %v1684, 4294901760
        %1968 = vmatpush1.msra.mxu0 %v1967
        %1969 = vmatprep.subr.mxu0 0.0
        %v1970 = vand.u32 %v1683, 4294901760
        %1971 = vmatpush1.msra.mxu0 %v1970
        %1972 = vmatprep.subr.mxu0 0.0
        %v1973 = vand.u32 %v1682, 4294901760
        %1974 = vmatpush1.msra.mxu0 %v1973
        %1975 = vmatprep.subr.mxu0 0.0
        %1976 = vmatpush2.msra.mxu0 0.0
        %1977 = vmatprep.subr.mxu0 0.0
        %1978 = vmatpush2.msra.mxu0 0.0
        %1979 = vmatprep.subr.mxu0 0.0
        %1980 = vmatpush2.msra.mxu0 0.0
        %1981 = vmatprep.subr.mxu0 0.0
        %1982 = vmatpush2.msra.mxu0 0.0
        %1983 = vmatprep.subr.mxu0 0.0
        %1984 = vmatpush2.msra.mxu0 0.0
        %1985 = vmatprep.subr.mxu0 0.0
        %1986 = vmatpush2.msra.mxu0 0.0
        %1987 = vmatprep.subr.mxu0 0.0
        %1988 = vmatpush2.msra.mxu0 0.0
        %1989 = vmatprep.subr.mxu0 0.0
        %1990 = vmatpush2.msra.mxu0 0.0
        %1991 = vmatprep.subr.mxu0 0.0
        %1992 = vmatpush2.msra.mxu0 0.0
        %1993 = vmatprep.subr.mxu0 0.0
        %1994 = vmatpush2.msra.mxu0 0.0
        %1995 = vmatprep.subr.mxu0 0.0
        %1996 = vmatpush2.msra.mxu0 0.0
        %1997 = vmatprep.subr.mxu0 0.0
        %1998 = vmatpush2.msra.mxu0 0.0
        %1999 = vmatprep.subr.mxu0 0.0
        %2000 = vmatpush2.msra.mxu0 0.0
        %2001 = vmatprep.subr.mxu0 0.0
        %2002 = vmatpush2.msra.mxu0 0.0
        %2003 = vmatprep.subr.mxu0 0.0
        %2004 = vmatpush2.msra.mxu0 0.0
        %2005 = vmatprep.subr.mxu0 0.0
        %2006 = vmatpush2.msra.mxu0 0.0
        %2007 = vmatprep.mubr.f32.mxu0 0.0
        %v2008 = vand.u32 %v1687, 4294901760
        %v2009 = vsub.f32 %v1687, %v2008
        %v2010 = vand.u32 %v2009, 4294901760
        %2011 = vmatmul.mubr.f32.gmra.mxu0 %v2010
        %v2012 = vpop.f32.mrf.mxu0
        %v2013 = vadd.f32 %v1936, %v2012
        %v2014 = vpop.f32.mrf.mxu0
        %2015 = vdwg.mxu0
        %2016 = vmatprep.subr.mxu0 0.0
        %2017 = vmatpush1.msra.mxu0 0.0
        %2018 = vmatprep.subr.mxu0 0.0
        %2019 = vmatpush1.msra.mxu0 0.0
        %2020 = vmatprep.subr.mxu0 0.0
        %2021 = vmatpush1.msra.mxu0 0.0
        %2022 = vmatprep.subr.mxu0 0.0
        %2023 = vmatpush1.msra.mxu0 0.0
        %2024 = vmatprep.subr.mxu0 0.0
        %2025 = vmatpush1.msra.mxu0 0.0
        %2026 = vmatprep.subr.mxu0 0.0
        %2027 = vmatpush1.msra.mxu0 0.0
        %2028 = vmatprep.subr.mxu0 0.0
        %2029 = vmatpush1.msra.mxu0 0.0
        %2030 = vmatprep.subr.mxu0 0.0
        %2031 = vmatpush1.msra.mxu0 0.0
        %2032 = vmatprep.subr.mxu0 0.0
        %2033 = vmatpush1.msra.mxu0 0.0
        %2034 = vmatprep.subr.mxu0 0.0
        %2035 = vmatpush1.msra.mxu0 0.0
        %2036 = vmatprep.subr.mxu0 0.0
        %2037 = vmatpush1.msra.mxu0 0.0
        %2038 = vmatprep.subr.mxu0 0.0
        %2039 = vmatpush1.msra.mxu0 0.0
        %2040 = vmatprep.subr.mxu0 0.0
        %v2041 = vand.u32 %v1685, 4294901760
        %v2042 = vsub.f32 %v1685, %v2041
        %v2043 = vand.u32 %v2042, 4294901760
        %2044 = vmatpush1.msra.mxu0 %v2043
        %2045 = vmatprep.subr.mxu0 0.0
        %v2046 = vand.u32 %v1684, 4294901760
        %v2047 = vsub.f32 %v1684, %v2046
        %v2048 = vand.u32 %v2047, 4294901760
        %2049 = vmatpush1.msra.mxu0 %v2048
        %2050 = vmatprep.subr.mxu0 0.0
        %v2051 = vand.u32 %v1683, 4294901760
        %v2052 = vsub.f32 %v1683, %v2051
        %v2053 = vand.u32 %v2052, 4294901760
        %2054 = vmatpush1.msra.mxu0 %v2053
        %2055 = vmatprep.subr.mxu0 0.0
        %v2056 = vand.u32 %v1682, 4294901760
        %v2057 = vsub.f32 %v1682, %v2056
        %v2058 = vand.u32 %v2057, 4294901760
        %2059 = vmatpush1.msra.mxu0 %v2058
        %2060 = vmatprep.subr.mxu0 0.0
        %2061 = vmatpush2.msra.mxu0 0.0
        %2062 = vmatprep.subr.mxu0 0.0
        %2063 = vmatpush2.msra.mxu0 0.0
        %2064 = vmatprep.subr.mxu0 0.0
        %2065 = vmatpush2.msra.mxu0 0.0
        %2066 = vmatprep.subr.mxu0 0.0
        %2067 = vmatpush2.msra.mxu0 0.0
        %2068 = vmatprep.subr.mxu0 0.0
        %2069 = vmatpush2.msra.mxu0 0.0
        %2070 = vmatprep.subr.mxu0 0.0
        %2071 = vmatpush2.msra.mxu0 0.0
        %2072 = vmatprep.subr.mxu0 0.0
        %2073 = vmatpush2.msra.mxu0 0.0
        %2074 = vmatprep.subr.mxu0 0.0
        %2075 = vmatpush2.msra.mxu0 0.0
        %2076 = vmatprep.subr.mxu0 0.0
        %2077 = vmatpush2.msra.mxu0 0.0
        %2078 = vmatprep.subr.mxu0 0.0
        %2079 = vmatpush2.msra.mxu0 0.0
        %2080 = vmatprep.subr.mxu0 0.0
        %2081 = vmatpush2.msra.mxu0 0.0
        %2082 = vmatprep.subr.mxu0 0.0
        %2083 = vmatpush2.msra.mxu0 0.0
        %2084 = vmatprep.subr.mxu0 0.0
        %2085 = vmatpush2.msra.mxu0 0.0
        %2086 = vmatprep.subr.mxu0 0.0
        %2087 = vmatpush2.msra.mxu0 0.0
        %2088 = vmatprep.subr.mxu0 0.0
        %2089 = vmatpush2.msra.mxu0 0.0
        %2090 = vmatprep.subr.mxu0 0.0
        %2091 = vmatpush2.msra.mxu0 0.0
        %2092 = vmatprep.mubr.f32.mxu0 0.0
        %v2093 = vand.u32 %v1687, 4294901760
        %2094 = vmatmul.mubr.f32.gmra.mxu0 %v2093
        %v2095 = vpop.f32.mrf.mxu0
        %v2096 = vadd.f32 %v2013, %v2095
        %v2097 = vpop.f32.mrf.mxu0
        %2098 = vdwg.mxu0
        %2099 = vmatprep.subr.mxu0 0.0
        %2100 = vmatpush1.msra.mxu0 0.0
        %2101 = vmatprep.subr.mxu0 0.0
        %2102 = vmatpush1.msra.mxu0 0.0
        %2103 = vmatprep.subr.mxu0 0.0
        %2104 = vmatpush1.msra.mxu0 0.0
        %2105 = vmatprep.subr.mxu0 0.0
        %2106 = vmatpush1.msra.mxu0 0.0
        %2107 = vmatprep.subr.mxu0 0.0
        %2108 = vmatpush1.msra.mxu0 0.0
        %2109 = vmatprep.subr.mxu0 0.0
        %2110 = vmatpush1.msra.mxu0 0.0
        %2111 = vmatprep.subr.mxu0 0.0
        %2112 = vmatpush1.msra.mxu0 0.0
        %2113 = vmatprep.subr.mxu0 0.0
        %2114 = vmatpush1.msra.mxu0 0.0
        %2115 = vmatprep.subr.mxu0 0.0
        %2116 = vmatpush1.msra.mxu0 0.0
        %2117 = vmatprep.subr.mxu0 0.0
        %2118 = vmatpush1.msra.mxu0 0.0
        %2119 = vmatprep.subr.mxu0 0.0
        %2120 = vmatpush1.msra.mxu0 0.0
        %2121 = vmatprep.subr.mxu0 0.0
        %2122 = vmatpush1.msra.mxu0 0.0
        %2123 = vmatprep.subr.mxu0 0.0
        %v2124 = vand.u32 %v1685, 4294901760
        %2125 = vmatpush1.msra.mxu0 %v2124
        %2126 = vmatprep.subr.mxu0 0.0
        %v2127 = vand.u32 %v1684, 4294901760
        %2128 = vmatpush1.msra.mxu0 %v2127
        %2129 = vmatprep.subr.mxu0 0.0
        %v2130 = vand.u32 %v1683, 4294901760
        %2131 = vmatpush1.msra.mxu0 %v2130
        %2132 = vmatprep.subr.mxu0 0.0
        %v2133 = vand.u32 %v1682, 4294901760
        %2134 = vmatpush1.msra.mxu0 %v2133
        %2135 = vmatprep.subr.mxu0 0.0
        %2136 = vmatpush2.msra.mxu0 0.0
        %2137 = vmatprep.subr.mxu0 0.0
        %2138 = vmatpush2.msra.mxu0 0.0
        %2139 = vmatprep.subr.mxu0 0.0
        %2140 = vmatpush2.msra.mxu0 0.0
        %2141 = vmatprep.subr.mxu0 0.0
        %2142 = vmatpush2.msra.mxu0 0.0
        %2143 = vmatprep.subr.mxu0 0.0
        %2144 = vmatpush2.msra.mxu0 0.0
        %2145 = vmatprep.subr.mxu0 0.0
        %2146 = vmatpush2.msra.mxu0 0.0
        %2147 = vmatprep.subr.mxu0 0.0
        %2148 = vmatpush2.msra.mxu0 0.0
        %2149 = vmatprep.subr.mxu0 0.0
        %2150 = vmatpush2.msra.mxu0 0.0
        %2151 = vmatprep.subr.mxu0 0.0
        %2152 = vmatpush2.msra.mxu0 0.0
        %2153 = vmatprep.subr.mxu0 0.0
        %2154 = vmatpush2.msra.mxu0 0.0
        %2155 = vmatprep.subr.mxu0 0.0
        %2156 = vmatpush2.msra.mxu0 0.0
        %2157 = vmatprep.subr.mxu0 0.0
        %2158 = vmatpush2.msra.mxu0 0.0
        %2159 = vmatprep.subr.mxu0 0.0
        %2160 = vmatpush2.msra.mxu0 0.0
        %2161 = vmatprep.subr.mxu0 0.0
        %2162 = vmatpush2.msra.mxu0 0.0
        %2163 = vmatprep.subr.mxu0 0.0
        %2164 = vmatpush2.msra.mxu0 0.0
        %2165 = vmatprep.subr.mxu0 0.0
        %2166 = vmatpush2.msra.mxu0 0.0
        %2167 = vmatprep.mubr.f32.mxu0 0.0
        %v2168 = vand.u32 %v1687, 4294901760
        %2169 = vmatmul.mubr.f32.gmra.mxu0 %v2168
        %v2170 = vpop.f32.mrf.mxu0
        %v2171 = vadd.f32 %v2096, %v2170
        %v2172 = vpop.f32.mrf.mxu0
        %2173 = vdwg.mxu0
        %v2174 = vadd.f32 %v1678, %v2171
        %2175 = vst [vmem:[%s193] sm:$0xff] %v2174
        %s2176 = sand.u32 %s91, 1
        %s2177 = scalar_lea.sflag [#allocation4], %s2176
        %s2178 = sand.u32 %s91, 1
        %s2179 = smul.addr %s2178, 8
        %s2180 = scalar_lea.vmem [#allocation7], %s2179
        // Predicated region
        $region37: #{tpu_custom_call.1} parent=27 // pred_check
          %p2181 = pneg %p101
        $region38: #{tpu_custom_call.1} parent=27 // pred_check_branch
          %2183 = sbr.rel (%p2181) target = $region40
        $region39: #{tpu_custom_call.1} parent=27 // pred_region
          %s2185 = ssub.s32 128, 128
          %2186 = vsyncadd %s2177, %s2185
          %s2187 = sadd.s32 %s25, %s24
          %s2188 = smul.addr %s2187, 128
          %s2189 = scalar_lea.hbm %s2, %s2188
          %s2191 = sshll.u32 %s2180, 4
          %s2192 = int_to_ptr.vmem [resolvable:$true] %s2191
          %2194 = dma.vmem_to_hbm [thread:$0]  %s2192, 128, %s2189, %s2177
        $region40: #{tpu_custom_call.1} parent=27 // pred_fallthru
          _
      $region28: #{tpu_custom_call.1} parent=5 // pred_fallthru
        _
      %p2195 = scmp.le.s32.totalorder 2, %s15
      // Predicated region
      $region41: #{tpu_custom_call.1} parent=5 // pred_check
        %p2196 = pneg %p2195
      $region42: #{tpu_custom_call.1} parent=5 // pred_check_branch
        %2198 = sbr.rel (%p2196) target = $region44
      $region43: #{tpu_custom_call.1} parent=5 // pred_region
        %s2199 = ssub.s32 %s15, 2
        // Predicated region
        $region45: #{tpu_custom_call.1} parent=43 // pred_check
          %p2200 = pneg %p107
        $region46: #{tpu_custom_call.1} parent=43 // pred_check_branch
          %2202 = sbr.rel (%p2200) target = $region48
        $region47: #{tpu_custom_call.1} parent=43 // pred_region
          %s2203 = sand.u32 %s92, 1
          %s2204 = scalar_lea.sflag [#allocation4], %s2203
          %s2205 = sand.u32 %s92, 1
          %s2206 = smul.addr %s2205, 8
          %s2207 = scalar_lea.vmem [#allocation7], %s2206
          %2208 = dma.done %s2204, 128
        $region48: #{tpu_custom_call.1} parent=43 // pred_fallthru
          _
      $region44: #{tpu_custom_call.1} parent=5 // pred_fallthru
        _
    $region6: #{tpu_custom_call.1} parent=1 // loop_footer
      %s19 = sadd.s32 1, %s15
    $region7: #{tpu_custom_call.1} parent=1 // loop_footer_branch
      %14 = sbr.rel target = $region3
    $region8: #{tpu_custom_call.1} parent=1 // loop_exit
      _
    %2209 = vsyncpa [#allocation3], 1
    %s2210 = scalar_lea.sflag [#allocation3], 1
    %2211 = vsyncpa %s2210, 1
    %2212 = vsyncpa [#allocation6], 1
    %2213 = vsyncpa [#allocation4], 1
    %s2214 = scalar_lea.sflag [#allocation4], 1
    %2215 = vsyncpa %s2214, 1

</llo_original>
